<compile_context>
chip_gen: v5e
topology: v5e:2x2
jax: 0.10.0
libtpu: 0.0.40
codegen_flags: <defaults>
</compile_context>

<pallas_src>
import functools

import jax
import jax.numpy as jnp
import numpy as np
from jax.experimental import pallas as pl
from jax.experimental.pallas import tpu as pltpu

# Full-f32 matmuls in the pure-JAX reference so the 1e-5 comparison against the
# kernel (which accumulates in f32 on the MXU) is meaningful.
jax.config.update("jax_default_matmul_precision", "highest")

_NEG_BIG = -1e30  # finite "minus infinity" (avoids inf-inf NaN corner cases)


# ---------------------------------------------------------------------------
# Pallas kernel: one (TS, E) sequence chunk of one bag per grid step.
# Grid = (B, ceil(S / TS)); scratch accumulators persist across the seq axis.
# ---------------------------------------------------------------------------
def _tanh_attn_kernel(x_ref, w1_ref, b1_ref, w2_ref, wc_ref, bc_ref,
                      emb_ref, logit_ref, m_sc, l_sc, acc_sc, *,
                      seq_len, seq_tile):
    sc = pl.program_id(1)

    @pl.when(sc == 0)
    def _init():
        m_sc[...] = jnp.full(m_sc.shape, _NEG_BIG, dtype=jnp.float32)
        l_sc[...] = jnp.zeros(l_sc.shape, dtype=jnp.float32)
        acc_sc[...] = jnp.zeros(acc_sc.shape, dtype=jnp.float32)

    x_blk = x_ref[...]                                        # (TS, E) f32

    # Attention MLP over the whole chunk: one (TS, E) @ (E, H) MXU matmul.
    # TODO(synk): optionally cast x/w1 to bf16 here if E/H ever grow enough for
    # the MXU to bind (kept f32 to hold the 1e-5 reference tolerance).
    h = jnp.tanh(
        jnp.dot(x_blk, w1_ref[...], preferred_element_type=jnp.float32)
        + b1_ref[...]                                         # (1, H) broadcast
    )                                                         # (TS, H)

    # Linear(H, 1) as a VPU multiply + lane reduction (no N=1 MXU matmul).
    # The scalar bias b2 is omitted: softmax over S is shift-invariant.
    al = jnp.sum(h * w2_ref[...], axis=-1, keepdims=True)     # (TS, 1)

    if seq_len % seq_tile != 0:   # mask the ragged tail chunk (if any)
        sid = jax.lax.broadcasted_iota(jnp.int32, al.shape, 0) + sc * seq_tile
        al = jnp.where(sid < seq_len, al, _NEG_BIG)

    # Online-softmax fold: chunk statistics computed ONCE per grid step.
    m_prev = m_sc[...]                                        # (1, 1)
    m_new = jnp.maximum(m_prev, jnp.max(al, axis=0, keepdims=True))
    alpha = jnp.exp(m_prev - m_new)                           # (1, 1)
    p = jnp.exp(al - m_new)                                   # (TS, 1)
    l_sc[...] = alpha * l_sc[...] + jnp.sum(p, axis=0, keepdims=True)
    acc_sc[...] = alpha * acc_sc[...] + jnp.sum(p * x_blk, axis=0, keepdims=True)
    m_sc[...] = m_new

    @pl.when(sc == pl.num_programs(1) - 1)
    def _finish():
        l = l_sc[...]
        inv_l = pl.reciprocal(l, approx=True)                 # EUP slot (free)
        inv_l = inv_l * (2.0 - l * inv_l)                     # 1 Newton step -> f32-exact
        emb = acc_sc[...] * inv_l                             # (1, E) == embeddings
        emb_ref[...] = emb
        logit_ref[...] = (
            jnp.dot(emb, wc_ref[...], preferred_element_type=jnp.float32)
            + bc_ref[...]                                     # (1, C) broadcast
        )


# ---------------------------------------------------------------------------
# Tiling / VMEM sizing helpers
# ---------------------------------------------------------------------------
def _vmem_capacity_bytes():
    """Per-core physical VMEM (v5e/v6e: 128 MiB, v7x: 64 MiB).  Falls back to
    the most conservative value if the query is unavailable."""
    try:
        return int(pltpu.get_tpu_info().vmem_capacity_bytes)
    except Exception:
        return 64 << 20


def _pick_seq_tile(S, E, weight_bytes, vmem_cap):
    """Largest sequence tile TS (multiple of 8, or the full S) whose
    double-buffered (TS, E) x block plus single-buffered weights stays well
    inside this generation's VMEM capacity."""
    x_budget = int(0.55 * vmem_cap) - weight_bytes
    x_budget = max(x_budget, 2 * 8 * E * 4)
    cap_rows = max(8, x_budget // (2 * E * 4))
    if S <= cap_rows:
        return S                      # whole bag in one chunk (full dim: legal)
    return max((int(cap_rows) // 8) * 8, 8)


# ---------------------------------------------------------------------------
# Wrapper
# ---------------------------------------------------------------------------
def tanh_attn_small_pallas(x_sbe, params, *, single_buffer_weights=True):
    """x_sbe: (S, B, E) float32 (native torch layout).
    Returns (embeddings (B, E), logits (B, C))."""
    S, B, E = x_sbe.shape
    H = params["w1"].shape[1]
    C = params["wc"].shape[1]

    # torch's x.permute(1, 0, 2): makes each bag's sequence chunk a contiguous
    # (TS, E) DMA for the kernel.
    xb = jnp.transpose(x_sbe, (1, 0, 2))                     # (B, S, E)
    w2_row = jnp.reshape(params["w2"], (1, H))               # (H,1) -> (1,H)

    weight_bytes = 4 * (E * H + H + H + E * C + C)
    vmem_cap = _vmem_capacity_bytes()
    TS = _pick_seq_tile(S, E, weight_bytes, vmem_cap)
    n_sc = pl.cdiv(S, TS)
    grid = (B, n_sc)                                         # batch parallel, seq reduction

    def _wspec(shape):
        # Constant-index weights: DMA'd once; single-buffer to halve their VMEM.
        if single_buffer_weights:
            return pl.BlockSpec(shape, lambda b, s: (0, 0),
                                pipeline_mode=pl.Buffered(1))
        return pl.BlockSpec(shape, lambda b, s: (0, 0))

    in_specs = [
        pl.BlockSpec((None, TS, E), lambda b, s: (b, s, 0)),  # x chunk (TS, E)
        _wspec((E, H)),                                       # w1
        _wspec((1, H)),                                       # b1
        _wspec((1, H)),                                       # w2 row
        _wspec((E, C)),                                       # wc
        _wspec((1, C)),                                       # bc
    ]
    out_specs = (
        pl.BlockSpec((None, 1, E), lambda b, s: (b, 0, 0)),   # embeddings
        pl.BlockSpec((None, 1, C), lambda b, s: (b, 0, 0)),   # logits
    )
    scratch_shapes = [
        pltpu.VMEM((1, 1), jnp.float32),   # running max  m
        pltpu.VMEM((1, 1), jnp.float32),   # running sum  l
        pltpu.VMEM((1, E), jnp.float32),   # weighted-sum accumulator
    ]

    # Explicit VMEM limit derived from the chosen tile (not the scoped default).
    needed = (2 * TS * E * 4
              + (1 if single_buffer_weights else 2) * weight_bytes
              + 4 * (2 * E + 2 * C + E + 2))
    vmem_limit = int(min(0.75 * vmem_cap, max(32 << 20, needed + (8 << 20))))

    cost = pl.CostEstimate(
        flops=2 * B * S * E * H + 3 * B * S * H + 4 * B * S * E + 2 * B * E * C,
        transcendentals=B * S * (H + 1) + B,
        bytes_accessed=4 * (B * S * E + E * H + 2 * H + E * C + C + B * E + B * C),
    )

    kern = functools.partial(_tanh_attn_kernel, seq_len=S, seq_tile=TS)
    emb3, log3 = pl.pallas_call(
        kern,
        out_shape=(
            jax.ShapeDtypeStruct((B, 1, E), jnp.float32),
            jax.ShapeDtypeStruct((B, 1, C), jnp.float32),
        ),
        grid=grid,
        in_specs=in_specs,
        out_specs=out_specs,
        scratch_shapes=scratch_shapes,
        compiler_params=pltpu.CompilerParams(
            dimension_semantics=("parallel", "arbitrary"),
            vmem_limit_bytes=vmem_limit,
        ),
        cost_estimate=cost,
    )(xb, params["w1"], params["b1"], w2_row, params["wc"], params["bc"])

    return jnp.reshape(emb3, (B, E)), jnp.reshape(log3, (B, C))


# ---------------------------------------------------------------------------
# Model + Encoder wrappers (glue only; compute lives in the kernel)
# ---------------------------------------------------------------------------
def model_forward(x_sbe, params):
    try:
        out = tanh_attn_small_pallas(x_sbe, params, single_buffer_weights=True)
        jax.block_until_ready(out)
        return out
    except Exception:
        # TODO(synk): pl.Buffered(1) pipeline_mode unavailable on this jax
        # build; fall back to default double-buffered weight blocks.
        return tanh_attn_small_pallas(x_sbe, params, single_buffer_weights=False)


def encoder_forward(x, params):
    # Encoder.forward: 5-D inputs (image models) loop over dim 1 and stack;
    # TanhAttnSmall inputs are 3-D (S, B, E), so the else branch runs.
    if x.ndim == 5:
        outs = [model_forward(x[:, i], params) for i in range(x.shape[1])]
        embs, logits = zip(*outs)
        return jnp.stack(embs), jnp.stack(logits)
    return model_forward(x, params)


# ---------------------------------------------------------------------------
# Pure-JAX reference (mirrors the torch module, including b2) for correctness
# ---------------------------------------------------------------------------
def reference_forward(x_sbe, p):
    xb = jnp.transpose(x_sbe, (1, 0, 2))        # (B, S, E)
    h = jnp.tanh(xb @ p["w1"] + p["b1"][0])
    al = h @ p["w2"] + p["b2"][0]               # (B, S, 1)  -- b2 kept here
    w = jax.nn.softmax(al, axis=1)
    attn_out = jnp.sum(w * xb, axis=1)          # (B, E)
    logits = attn_out @ p["wc"] + p["bc"][0]
    return attn_out, logits


def make_params(key, embedding_dim, hidden_dim, n_classes):
    k1, k2, k3, k4, k5, k6 = jax.random.split(key, 6)
    scale = 0.1
    return {
        "w1": (scale * jax.random.normal(k1, (embedding_dim, hidden_dim))).astype(jnp.float32),
        "b1": (scale * jax.random.normal(k2, (1, hidden_dim))).astype(jnp.float32),
        "w2": (scale * jax.random.normal(k3, (hidden_dim, 1))).astype(jnp.float32),
        "b2": (scale * jax.random.normal(k4, (1, 1))).astype(jnp.float32),
        "wc": (scale * jax.random.normal(k5, (embedding_dim, n_classes))).astype(jnp.float32),
        "bc": (scale * jax.random.normal(k6, (1, n_classes))).astype(jnp.float32),
    }


if __name__ == "__main__":
    S, B, E = 8, 2, 32           # seq_len, batch, embedding_dim
    H, C = E // 2, 4             # hidden_dim = embedding_dim // 2, output_dim

    key = jax.random.PRNGKey(0)
    kx, kp = jax.random.split(key)
    x = jax.random.normal(kx, (S, B, E), dtype=jnp.float32)   # native torch (S, B, E)
    params = make_params(kp, E, H, C)

    embeddings, logits = jax.block_until_ready(encoder_forward(x, params))
    ref_emb, ref_log = reference_forward(x, params)

    np.testing.assert_allclose(np.asarray(embeddings), np.asarray(ref_emb),
                               rtol=1e-5, atol=1e-5)
    np.testing.assert_allclose(np.asarray(logits), np.asarray(ref_log),
                               rtol=1e-5, atol=1e-5)
    assert embeddings.shape == (B, E) and logits.shape == (B, C)
    print("KERNEL_OK")
</pallas_src>

<mosaic_0001>
module attributes {stable_mosaic.version = 11 : i64} {
  func.func @_tanh_attn_kernel(%arg0: i32, %arg1: i32, %arg2: memref<1x8x32xf32, #tpu.memory_space<vmem>>, %arg3: memref<32x16xf32, #tpu.memory_space<vmem>>, %arg4: memref<1x16xf32, #tpu.memory_space<vmem>>, %arg5: memref<1x16xf32, #tpu.memory_space<vmem>>, %arg6: memref<32x4xf32, #tpu.memory_space<vmem>>, %arg7: memref<1x4xf32, #tpu.memory_space<vmem>>, %arg8: memref<1x1x32xf32, #tpu.memory_space<vmem>>, %arg9: memref<1x1x4xf32, #tpu.memory_space<vmem>>, %arg10: memref<1x1xf32, #tpu.memory_space<vmem>>, %arg11: memref<1x1xf32, #tpu.memory_space<vmem>>, %arg12: memref<1x32xf32, #tpu.memory_space<vmem>>) attributes {dimension_semantics = [#tpu.dimension_semantics<parallel>, #tpu.dimension_semantics<arbitrary>], iteration_bounds = array<i64: 2, 1>, scalar_prefetch = 0 : i64, scratch_operands = 3 : i64, tpu.core_type = #tpu.core_type<tc>, window_params = [{transform_indices = @transform_0, window_bounds = array<i64: 1, 8, 32>}, {pipeline_mode = #tpu.pipeline_mode<synchronous>, transform_indices = @transform_1, window_bounds = array<i64: 32, 16>}, {pipeline_mode = #tpu.pipeline_mode<synchronous>, transform_indices = @transform_2, window_bounds = array<i64: 1, 16>}, {pipeline_mode = #tpu.pipeline_mode<synchronous>, transform_indices = @transform_3, window_bounds = array<i64: 1, 16>}, {pipeline_mode = #tpu.pipeline_mode<synchronous>, transform_indices = @transform_4, window_bounds = array<i64: 32, 4>}, {pipeline_mode = #tpu.pipeline_mode<synchronous>, transform_indices = @transform_5, window_bounds = array<i64: 1, 4>}, {transform_indices = @transform_6, window_bounds = array<i64: 1, 1, 32>}, {transform_indices = @transform_7, window_bounds = array<i64: 1, 1, 4>}]} {
    %c0_i32 = arith.constant 0 : i32
    %0 = arith.cmpi eq, %arg1, %c0_i32 : i32
    %1 = arith.extui %0 : i1 to i32
    %c0_i32_0 = arith.constant 0 : i32
    %2 = arith.cmpi ne, %1, %c0_i32_0 : i32
    scf.if %2 {
      %cst_27 = arith.constant -1.000000e+30 : f32
      %44 = vector.broadcast %cst_27 : f32 to vector<1x1xf32>
      %c0_28 = arith.constant 0 : index
      %c0_29 = arith.constant 0 : index
      %45 = vector.load %arg10[%c0_28, %c0_29] : memref<1x1xf32, #tpu.memory_space<vmem>>, vector<1x1xf32>
      tpu.vector_store %arg10[%c0_28, %c0_29], %44 {strides = array<i32>} : memref<1x1xf32, #tpu.memory_space<vmem>>, vector<1x1xf32>,
      %cst_30 = arith.constant 0.000000e+00 : f32
      %46 = vector.broadcast %cst_30 : f32 to vector<1x1xf32>
      %c0_31 = arith.constant 0 : index
      %c0_32 = arith.constant 0 : index
      %47 = vector.load %arg11[%c0_31, %c0_32] : memref<1x1xf32, #tpu.memory_space<vmem>>, vector<1x1xf32>
      tpu.vector_store %arg11[%c0_31, %c0_32], %46 {strides = array<i32>} : memref<1x1xf32, #tpu.memory_space<vmem>>, vector<1x1xf32>,
      %cst_33 = arith.constant 0.000000e+00 : f32
      %48 = vector.broadcast %cst_33 : f32 to vector<1x32xf32>
      %c0_34 = arith.constant 0 : index
      %c0_35 = arith.constant 0 : index
      %49 = vector.load %arg12[%c0_34, %c0_35] : memref<1x32xf32, #tpu.memory_space<vmem>>, vector<1x32xf32>
      tpu.vector_store %arg12[%c0_34, %c0_35], %48 {strides = array<i32>} : memref<1x32xf32, #tpu.memory_space<vmem>>, vector<1x32xf32>,
    } else {
    }
    %c0 = arith.constant 0 : index
    %c0_1 = arith.constant 0 : index
    %c0_2 = arith.constant 0 : index
    %3 = vector.load %arg2[%c0, %c0_1, %c0_2] : memref<1x8x32xf32, #tpu.memory_space<vmem>>, vector<1x8x32xf32>
    %4 = vector.shape_cast %3 : vector<1x8x32xf32> to vector<8x32xf32>
    %c0_3 = arith.constant 0 : index
    %c0_4 = arith.constant 0 : index
    %5 = vector.load %arg3[%c0_3, %c0_4] : memref<32x16xf32, #tpu.memory_space<vmem>>, vector<32x16xf32>
    %cst = arith.constant dense<0.000000e+00> : vector<8x16xf32>
    %6 = tpu.matmul %4, %5, %cst {dimension_numbers = #tpu.dot_dimension_numbers<[1], [0], [0], [1], [0, 0, 1, 1], [], []>, precision = #tpu.contract_precision<fp32>} : vector<8x32xf32>, vector<32x16xf32>, vector<8x16xf32> -> vector<8x16xf32>
    %c0_5 = arith.constant 0 : index
    %c0_6 = arith.constant 0 : index
    %7 = vector.load %arg4[%c0_5, %c0_6] : memref<1x16xf32, #tpu.memory_space<vmem>>, vector<1x16xf32>
    %8 = vector.broadcast %7 : vector<1x16xf32> to vector<8x16xf32>
    %9 = arith.addf %6, %8 : vector<8x16xf32>
    %10 = math.tanh %9 : vector<8x16xf32>
    %c0_7 = arith.constant 0 : index
    %c0_8 = arith.constant 0 : index
    %11 = vector.load %arg5[%c0_7, %c0_8] : memref<1x16xf32, #tpu.memory_space<vmem>>, vector<1x16xf32>
    %12 = vector.broadcast %11 : vector<1x16xf32> to vector<8x16xf32>
    %13 = arith.mulf %10, %12 : vector<8x16xf32>
    %cst_9 = arith.constant dense<0.000000e+00> : vector<8xf32>
    %14 = vector.multi_reduction <add>, %13, %cst_9 [1] : vector<8x16xf32> to vector<8xf32>
    %15 = vector.shape_cast %14 : vector<8xf32> to vector<8x1xf32>
    %c0_10 = arith.constant 0 : index
    %c0_11 = arith.constant 0 : index
    %16 = vector.load %arg10[%c0_10, %c0_11] : memref<1x1xf32, #tpu.memory_space<vmem>>, vector<1x1xf32>
    %cst_12 = arith.constant dense<0xFF800000> : vector<1xf32>
    %17 = vector.multi_reduction <maximumf>, %15, %cst_12 [0] : vector<8x1xf32> to vector<1xf32>
    %18 = vector.shape_cast %17 : vector<1xf32> to vector<1x1xf32>
    %19 = arith.maximumf %16, %18 : vector<1x1xf32>
    %20 = arith.subf %16, %19 : vector<1x1xf32>
    %21 = math.exp %20 : vector<1x1xf32>
    %22 = vector.broadcast %19 : vector<1x1xf32> to vector<8x1xf32>
    %23 = arith.subf %15, %22 : vector<8x1xf32>
    %24 = math.exp %23 : vector<8x1xf32>
    %c0_13 = arith.constant 0 : index
    %c0_14 = arith.constant 0 : index
    %25 = vector.load %arg11[%c0_13, %c0_14] : memref<1x1xf32, #tpu.memory_space<vmem>>, vector<1x1xf32>
    %26 = arith.mulf %21, %25 : vector<1x1xf32>
    %cst_15 = arith.constant dense<0.000000e+00> : vector<1xf32>
    %27 = vector.multi_reduction <add>, %24, %cst_15 [0] : vector<8x1xf32> to vector<1xf32>
    %28 = vector.shape_cast %27 : vector<1xf32> to vector<1x1xf32>
    %29 = arith.addf %26, %28 : vector<1x1xf32>
    %c0_16 = arith.constant 0 : index
    %c0_17 = arith.constant 0 : index
    %30 = vector.load %arg11[%c0_16, %c0_17] : memref<1x1xf32, #tpu.memory_space<vmem>>, vector<1x1xf32>
    tpu.vector_store %arg11[%c0_16, %c0_17], %29 {strides = array<i32>} : memref<1x1xf32, #tpu.memory_space<vmem>>, vector<1x1xf32>,
    %c0_18 = arith.constant 0 : index
    %c0_19 = arith.constant 0 : index
    %31 = vector.load %arg12[%c0_18, %c0_19] : memref<1x32xf32, #tpu.memory_space<vmem>>, vector<1x32xf32>
    %32 = vector.broadcast %21 : vector<1x1xf32> to vector<1x32xf32>
    %33 = arith.mulf %32, %31 : vector<1x32xf32>
    %34 = vector.broadcast %24 : vector<8x1xf32> to vector<8x32xf32>
    %35 = arith.mulf %34, %4 : vector<8x32xf32>
    %cst_20 = arith.constant dense<0.000000e+00> : vector<32xf32>
    %36 = vector.multi_reduction <add>, %35, %cst_20 [0] : vector<8x32xf32> to vector<32xf32>
    %37 = vector.shape_cast %36 : vector<32xf32> to vector<1x32xf32>
    %38 = arith.addf %33, %37 : vector<1x32xf32>
    %c0_21 = arith.constant 0 : index
    %c0_22 = arith.constant 0 : index
    %39 = vector.load %arg12[%c0_21, %c0_22] : memref<1x32xf32, #tpu.memory_space<vmem>>, vector<1x32xf32>
    tpu.vector_store %arg12[%c0_21, %c0_22], %38 {strides = array<i32>} : memref<1x32xf32, #tpu.memory_space<vmem>>, vector<1x32xf32>,
    %c0_23 = arith.constant 0 : index
    %c0_24 = arith.constant 0 : index
    %40 = vector.load %arg10[%c0_23, %c0_24] : memref<1x1xf32, #tpu.memory_space<vmem>>, vector<1x1xf32>
    tpu.vector_store %arg10[%c0_23, %c0_24], %19 {strides = array<i32>} : memref<1x1xf32, #tpu.memory_space<vmem>>, vector<1x1xf32>,
    %c0_i32_25 = arith.constant 0 : i32
    %41 = arith.cmpi eq, %arg1, %c0_i32_25 : i32
    %42 = arith.extui %41 : i1 to i32
    %c0_i32_26 = arith.constant 0 : i32
    %43 = arith.cmpi ne, %42, %c0_i32_26 : i32
    scf.if %43 {
      %c0_27 = arith.constant 0 : index
      %c0_28 = arith.constant 0 : index
      %44 = vector.load %arg11[%c0_27, %c0_28] : memref<1x1xf32, #tpu.memory_space<vmem>>, vector<1x1xf32>
      %45 = tpu.reciprocal %44 {approx = true} : vector<1x1xf32> -> vector<1x1xf32>
      %46 = arith.mulf %44, %45 : vector<1x1xf32>
      %cst_29 = arith.constant 2.000000e+00 : f32
      %47 = vector.broadcast %cst_29 : f32 to vector<1x1xf32>
      %48 = arith.subf %47, %46 : vector<1x1xf32>
      %49 = arith.mulf %45, %48 : vector<1x1xf32>
      %c0_30 = arith.constant 0 : index
      %c0_31 = arith.constant 0 : index
      %50 = vector.load %arg12[%c0_30, %c0_31] : memref<1x32xf32, #tpu.memory_space<vmem>>, vector<1x32xf32>
      %51 = vector.broadcast %49 : vector<1x1xf32> to vector<1x32xf32>
      %52 = arith.mulf %50, %51 : vector<1x32xf32>
      %c0_32 = arith.constant 0 : index
      %c0_33 = arith.constant 0 : index
      %c0_34 = arith.constant 0 : index
      %53 = vector.load %arg8[%c0_32, %c0_33, %c0_34] : memref<1x1x32xf32, #tpu.memory_space<vmem>>, vector<1x1x32xf32>
      %54 = vector.shape_cast %53 : vector<1x1x32xf32> to vector<1x32xf32>
      %55 = vector.shape_cast %52 : vector<1x32xf32> to vector<1x1x32xf32>
      tpu.vector_store %arg8[%c0_32, %c0_33, %c0_34], %55 {strides = array<i32>} : memref<1x1x32xf32, #tpu.memory_space<vmem>>, vector<1x1x32xf32>,
      %c0_35 = arith.constant 0 : index
      %c0_36 = arith.constant 0 : index
      %56 = vector.load %arg6[%c0_35, %c0_36] : memref<32x4xf32, #tpu.memory_space<vmem>>, vector<32x4xf32>
      %cst_37 = arith.constant dense<0.000000e+00> : vector<1x4xf32>
      %57 = tpu.matmul %52, %56, %cst_37 {dimension_numbers = #tpu.dot_dimension_numbers<[1], [0], [0], [1], [0, 0, 1, 1], [], []>, precision = #tpu.contract_precision<fp32>} : vector<1x32xf32>, vector<32x4xf32>, vector<1x4xf32> -> vector<1x4xf32>
      %c0_38 = arith.constant 0 : index
      %c0_39 = arith.constant 0 : index
      %58 = vector.load %arg7[%c0_38, %c0_39] : memref<1x4xf32, #tpu.memory_space<vmem>>, vector<1x4xf32>
      %59 = arith.addf %57, %58 : vector<1x4xf32>
      %c0_40 = arith.constant 0 : index
      %c0_41 = arith.constant 0 : index
      %c0_42 = arith.constant 0 : index
      %60 = vector.load %arg9[%c0_40, %c0_41, %c0_42] : memref<1x1x4xf32, #tpu.memory_space<vmem>>, vector<1x1x4xf32>
      %61 = vector.shape_cast %60 : vector<1x1x4xf32> to vector<1x4xf32>
      %62 = vector.shape_cast %59 : vector<1x4xf32> to vector<1x1x4xf32>
      tpu.vector_store %arg9[%c0_40, %c0_41, %c0_42], %62 {strides = array<i32>} : memref<1x1x4xf32, #tpu.memory_space<vmem>>, vector<1x1x4xf32>,
    } else {
    }
    return
  }
  func.func @transform_0(%arg0: i32, %arg1: i32) -> (i32, i32, i32) {
    %c0_i32 = arith.constant 0 : i32
    %c0_i32_0 = arith.constant 0 : i32
    return %arg0, %arg1, %c0_i32 : i32, i32, i32
  }
  func.func @transform_1(%arg0: i32, %arg1: i32) -> (i32, i32) {
    %c0_i32 = arith.constant 0 : i32
    %c0_i32_0 = arith.constant 0 : i32
    %c0_i32_1 = arith.constant 0 : i32
    return %c0_i32, %c0_i32_0 : i32, i32
  }
  func.func @transform_2(%arg0: i32, %arg1: i32) -> (i32, i32) {
    %c0_i32 = arith.constant 0 : i32
    %c0_i32_0 = arith.constant 0 : i32
    %c0_i32_1 = arith.constant 0 : i32
    return %c0_i32, %c0_i32_0 : i32, i32
  }
  func.func @transform_3(%arg0: i32, %arg1: i32) -> (i32, i32) {
    %c0_i32 = arith.constant 0 : i32
    %c0_i32_0 = arith.constant 0 : i32
    %c0_i32_1 = arith.constant 0 : i32
    return %c0_i32, %c0_i32_0 : i32, i32
  }
  func.func @transform_4(%arg0: i32, %arg1: i32) -> (i32, i32) {
    %c0_i32 = arith.constant 0 : i32
    %c0_i32_0 = arith.constant 0 : i32
    %c0_i32_1 = arith.constant 0 : i32
    return %c0_i32, %c0_i32_0 : i32, i32
  }
  func.func @transform_5(%arg0: i32, %arg1: i32) -> (i32, i32) {
    %c0_i32 = arith.constant 0 : i32
    %c0_i32_0 = arith.constant 0 : i32
    %c0_i32_1 = arith.constant 0 : i32
    return %c0_i32, %c0_i32_0 : i32, i32
  }
  func.func @transform_6(%arg0: i32, %arg1: i32) -> (i32, i32, i32) {
    %c0_i32 = arith.constant 0 : i32
    %c0_i32_0 = arith.constant 0 : i32
    %c0_i32_1 = arith.constant 0 : i32
    return %arg0, %c0_i32, %c0_i32_0 : i32, i32, i32
  }
  func.func @transform_7(%arg0: i32, %arg1: i32) -> (i32, i32, i32) {
    %c0_i32 = arith.constant 0 : i32
    %c0_i32_0 = arith.constant 0 : i32
    %c0_i32_1 = arith.constant 0 : i32
    return %arg0, %c0_i32, %c0_i32_0 : i32, i32, i32
  }
}

module attributes {stable_mosaic.version = 11 : i64} {
  func.func @_tanh_attn_kernel(%arg0: i32, %arg1: i32, %arg2: memref<1x8x32xf32, #tpu.memory_space<vmem>>, %arg3: memref<32x16xf32, #tpu.memory_space<vmem>>, %arg4: memref<1x16xf32, #tpu.memory_space<vmem>>, %arg5: memref<1x16xf32, #tpu.memory_space<vmem>>, %arg6: memref<32x4xf32, #tpu.memory_space<vmem>>, %arg7: memref<1x4xf32, #tpu.memory_space<vmem>>, %arg8: memref<1x1x32xf32, #tpu.memory_space<vmem>>, %arg9: memref<1x1x4xf32, #tpu.memory_space<vmem>>, %arg10: memref<1x1xf32, #tpu.memory_space<vmem>>, %arg11: memref<1x1xf32, #tpu.memory_space<vmem>>, %arg12: memref<1x32xf32, #tpu.memory_space<vmem>>) attributes {dimension_semantics = [#tpu.dimension_semantics<parallel>, #tpu.dimension_semantics<arbitrary>], iteration_bounds = array<i64: 2, 1>, scalar_prefetch = 0 : i64, scratch_operands = 3 : i64, tpu.core_type = #tpu.core_type<tc>, window_params = [{transform_indices = @transform_0, window_bounds = array<i64: 1, 8, 32>}, {pipeline_mode = #tpu.pipeline_mode<synchronous>, transform_indices = @transform_1, window_bounds = array<i64: 32, 16>}, {pipeline_mode = #tpu.pipeline_mode<synchronous>, transform_indices = @transform_2, window_bounds = array<i64: 1, 16>}, {pipeline_mode = #tpu.pipeline_mode<synchronous>, transform_indices = @transform_3, window_bounds = array<i64: 1, 16>}, {pipeline_mode = #tpu.pipeline_mode<synchronous>, transform_indices = @transform_4, window_bounds = array<i64: 32, 4>}, {pipeline_mode = #tpu.pipeline_mode<synchronous>, transform_indices = @transform_5, window_bounds = array<i64: 1, 4>}, {transform_indices = @transform_6, window_bounds = array<i64: 1, 1, 32>}, {transform_indices = @transform_7, window_bounds = array<i64: 1, 1, 4>}]} {
    %c0_i32 = arith.constant 0 : i32
    %0 = arith.cmpi eq, %arg1, %c0_i32 : i32
    %1 = arith.extui %0 : i1 to i32
    %c0_i32_0 = arith.constant 0 : i32
    %2 = arith.cmpi ne, %1, %c0_i32_0 : i32
    scf.if %2 {
      %cst_27 = arith.constant -1.000000e+30 : f32
      %44 = vector.broadcast %cst_27 : f32 to vector<1x1xf32>
      %c0_28 = arith.constant 0 : index
      %c0_29 = arith.constant 0 : index
      %45 = vector.load %arg10[%c0_28, %c0_29] : memref<1x1xf32, #tpu.memory_space<vmem>>, vector<1x1xf32>
      tpu.vector_store %arg10[%c0_28, %c0_29], %44 {strides = array<i32>} : memref<1x1xf32, #tpu.memory_space<vmem>>, vector<1x1xf32>,
      %cst_30 = arith.constant 0.000000e+00 : f32
      %46 = vector.broadcast %cst_30 : f32 to vector<1x1xf32>
      %c0_31 = arith.constant 0 : index
      %c0_32 = arith.constant 0 : index
      %47 = vector.load %arg11[%c0_31, %c0_32] : memref<1x1xf32, #tpu.memory_space<vmem>>, vector<1x1xf32>
      tpu.vector_store %arg11[%c0_31, %c0_32], %46 {strides = array<i32>} : memref<1x1xf32, #tpu.memory_space<vmem>>, vector<1x1xf32>,
      %cst_33 = arith.constant 0.000000e+00 : f32
      %48 = vector.broadcast %cst_33 : f32 to vector<1x32xf32>
      %c0_34 = arith.constant 0 : index
      %c0_35 = arith.constant 0 : index
      %49 = vector.load %arg12[%c0_34, %c0_35] : memref<1x32xf32, #tpu.memory_space<vmem>>, vector<1x32xf32>
      tpu.vector_store %arg12[%c0_34, %c0_35], %48 {strides = array<i32>} : memref<1x32xf32, #tpu.memory_space<vmem>>, vector<1x32xf32>,
    } else {
    }
    %c0 = arith.constant 0 : index
    %c0_1 = arith.constant 0 : index
    %c0_2 = arith.constant 0 : index
    %3 = vector.load %arg2[%c0, %c0_1, %c0_2] : memref<1x8x32xf32, #tpu.memory_space<vmem>>, vector<1x8x32xf32>
    %4 = vector.shape_cast %3 : vector<1x8x32xf32> to vector<8x32xf32>
    %c0_3 = arith.constant 0 : index
    %c0_4 = arith.constant 0 : index
    %5 = vector.load %arg3[%c0_3, %c0_4] : memref<32x16xf32, #tpu.memory_space<vmem>>, vector<32x16xf32>
    %cst = arith.constant dense<0.000000e+00> : vector<8x16xf32>
    %6 = tpu.matmul %4, %5, %cst {dimension_numbers = #tpu.dot_dimension_numbers<[1], [0], [0], [1], [0, 0, 1, 1], [], []>, precision = #tpu.contract_precision<fp32>} : vector<8x32xf32>, vector<32x16xf32>, vector<8x16xf32> -> vector<8x16xf32>
    %c0_5 = arith.constant 0 : index
    %c0_6 = arith.constant 0 : index
    %7 = vector.load %arg4[%c0_5, %c0_6] : memref<1x16xf32, #tpu.memory_space<vmem>>, vector<1x16xf32>
    %8 = vector.broadcast %7 : vector<1x16xf32> to vector<8x16xf32>
    %9 = arith.addf %6, %8 : vector<8x16xf32>
    %10 = math.tanh %9 : vector<8x16xf32>
    %c0_7 = arith.constant 0 : index
    %c0_8 = arith.constant 0 : index
    %11 = vector.load %arg5[%c0_7, %c0_8] : memref<1x16xf32, #tpu.memory_space<vmem>>, vector<1x16xf32>
    %12 = vector.broadcast %11 : vector<1x16xf32> to vector<8x16xf32>
    %13 = arith.mulf %10, %12 : vector<8x16xf32>
    %cst_9 = arith.constant dense<0.000000e+00> : vector<8xf32>
    %14 = vector.multi_reduction <add>, %13, %cst_9 [1] : vector<8x16xf32> to vector<8xf32>
    %15 = vector.shape_cast %14 : vector<8xf32> to vector<8x1xf32>
    %c0_10 = arith.constant 0 : index
    %c0_11 = arith.constant 0 : index
    %16 = vector.load %arg10[%c0_10, %c0_11] : memref<1x1xf32, #tpu.memory_space<vmem>>, vector<1x1xf32>
    %cst_12 = arith.constant dense<0xFF800000> : vector<1xf32>
    %17 = vector.multi_reduction <maximumf>, %15, %cst_12 [0] : vector<8x1xf32> to vector<1xf32>
    %18 = vector.shape_cast %17 : vector<1xf32> to vector<1x1xf32>
    %19 = arith.maximumf %16, %18 : vector<1x1xf32>
    %20 = arith.subf %16, %19 : vector<1x1xf32>
    %21 = math.exp %20 : vector<1x1xf32>
    %22 = vector.broadcast %19 : vector<1x1xf32> to vector<8x1xf32>
    %23 = arith.subf %15, %22 : vector<8x1xf32>
    %24 = math.exp %23 : vector<8x1xf32>
    %c0_13 = arith.constant 0 : index
    %c0_14 = arith.constant 0 : index
    %25 = vector.load %arg11[%c0_13, %c0_14] : memref<1x1xf32, #tpu.memory_space<vmem>>, vector<1x1xf32>
    %26 = arith.mulf %21, %25 : vector<1x1xf32>
    %cst_15 = arith.constant dense<0.000000e+00> : vector<1xf32>
    %27 = vector.multi_reduction <add>, %24, %cst_15 [0] : vector<8x1xf32> to vector<1xf32>
    %28 = vector.shape_cast %27 : vector<1xf32> to vector<1x1xf32>
    %29 = arith.addf %26, %28 : vector<1x1xf32>
    %c0_16 = arith.constant 0 : index
    %c0_17 = arith.constant 0 : index
    %30 = vector.load %arg11[%c0_16, %c0_17] : memref<1x1xf32, #tpu.memory_space<vmem>>, vector<1x1xf32>
    tpu.vector_store %arg11[%c0_16, %c0_17], %29 {strides = array<i32>} : memref<1x1xf32, #tpu.memory_space<vmem>>, vector<1x1xf32>,
    %c0_18 = arith.constant 0 : index
    %c0_19 = arith.constant 0 : index
    %31 = vector.load %arg12[%c0_18, %c0_19] : memref<1x32xf32, #tpu.memory_space<vmem>>, vector<1x32xf32>
    %32 = vector.broadcast %21 : vector<1x1xf32> to vector<1x32xf32>
    %33 = arith.mulf %32, %31 : vector<1x32xf32>
    %34 = vector.broadcast %24 : vector<8x1xf32> to vector<8x32xf32>
    %35 = arith.mulf %34, %4 : vector<8x32xf32>
    %cst_20 = arith.constant dense<0.000000e+00> : vector<32xf32>
    %36 = vector.multi_reduction <add>, %35, %cst_20 [0] : vector<8x32xf32> to vector<32xf32>
    %37 = vector.shape_cast %36 : vector<32xf32> to vector<1x32xf32>
    %38 = arith.addf %33, %37 : vector<1x32xf32>
    %c0_21 = arith.constant 0 : index
    %c0_22 = arith.constant 0 : index
    %39 = vector.load %arg12[%c0_21, %c0_22] : memref<1x32xf32, #tpu.memory_space<vmem>>, vector<1x32xf32>
    tpu.vector_store %arg12[%c0_21, %c0_22], %38 {strides = array<i32>} : memref<1x32xf32, #tpu.memory_space<vmem>>, vector<1x32xf32>,
    %c0_23 = arith.constant 0 : index
    %c0_24 = arith.constant 0 : index
    %40 = vector.load %arg10[%c0_23, %c0_24] : memref<1x1xf32, #tpu.memory_space<vmem>>, vector<1x1xf32>
    tpu.vector_store %arg10[%c0_23, %c0_24], %19 {strides = array<i32>} : memref<1x1xf32, #tpu.memory_space<vmem>>, vector<1x1xf32>,
    %c0_i32_25 = arith.constant 0 : i32
    %41 = arith.cmpi eq, %arg1, %c0_i32_25 : i32
    %42 = arith.extui %41 : i1 to i32
    %c0_i32_26 = arith.constant 0 : i32
    %43 = arith.cmpi ne, %42, %c0_i32_26 : i32
    scf.if %43 {
      %c0_27 = arith.constant 0 : index
      %c0_28 = arith.constant 0 : index
      %44 = vector.load %arg11[%c0_27, %c0_28] : memref<1x1xf32, #tpu.memory_space<vmem>>, vector<1x1xf32>
      %45 = tpu.reciprocal %44 {approx = true} : vector<1x1xf32> -> vector<1x1xf32>
      %46 = arith.mulf %44, %45 : vector<1x1xf32>
      %cst_29 = arith.constant 2.000000e+00 : f32
      %47 = vector.broadcast %cst_29 : f32 to vector<1x1xf32>
      %48 = arith.subf %47, %46 : vector<1x1xf32>
      %49 = arith.mulf %45, %48 : vector<1x1xf32>
      %c0_30 = arith.constant 0 : index
      %c0_31 = arith.constant 0 : index
      %50 = vector.load %arg12[%c0_30, %c0_31] : memref<1x32xf32, #tpu.memory_space<vmem>>, vector<1x32xf32>
      %51 = vector.broadcast %49 : vector<1x1xf32> to vector<1x32xf32>
      %52 = arith.mulf %50, %51 : vector<1x32xf32>
      %c0_32 = arith.constant 0 : index
      %c0_33 = arith.constant 0 : index
      %c0_34 = arith.constant 0 : index
      %53 = vector.load %arg8[%c0_32, %c0_33, %c0_34] : memref<1x1x32xf32, #tpu.memory_space<vmem>>, vector<1x1x32xf32>
      %54 = vector.shape_cast %53 : vector<1x1x32xf32> to vector<1x32xf32>
      %55 = vector.shape_cast %52 : vector<1x32xf32> to vector<1x1x32xf32>
      tpu.vector_store %arg8[%c0_32, %c0_33, %c0_34], %55 {strides = array<i32>} : memref<1x1x32xf32, #tpu.memory_space<vmem>>, vector<1x1x32xf32>,
      %c0_35 = arith.constant 0 : index
      %c0_36 = arith.constant 0 : index
      %56 = vector.load %arg6[%c0_35, %c0_36] : memref<32x4xf32, #tpu.memory_space<vmem>>, vector<32x4xf32>
      %cst_37 = arith.constant dense<0.000000e+00> : vector<1x4xf32>
      %57 = tpu.matmul %52, %56, %cst_37 {dimension_numbers = #tpu.dot_dimension_numbers<[1], [0], [0], [1], [0, 0, 1, 1], [], []>, precision = #tpu.contract_precision<fp32>} : vector<1x32xf32>, vector<32x4xf32>, vector<1x4xf32> -> vector<1x4xf32>
      %c0_38 = arith.constant 0 : index
      %c0_39 = arith.constant 0 : index
      %58 = vector.load %arg7[%c0_38, %c0_39] : memref<1x4xf32, #tpu.memory_space<vmem>>, vector<1x4xf32>
      %59 = arith.addf %57, %58 : vector<1x4xf32>
      %c0_40 = arith.constant 0 : index
      %c0_41 = arith.constant 0 : index
      %c0_42 = arith.constant 0 : index
      %60 = vector.load %arg9[%c0_40, %c0_41, %c0_42] : memref<1x1x4xf32, #tpu.memory_space<vmem>>, vector<1x1x4xf32>
      %61 = vector.shape_cast %60 : vector<1x1x4xf32> to vector<1x4xf32>
      %62 = vector.shape_cast %59 : vector<1x4xf32> to vector<1x1x4xf32>
      tpu.vector_store %arg9[%c0_40, %c0_41, %c0_42], %62 {strides = array<i32>} : memref<1x1x4xf32, #tpu.memory_space<vmem>>, vector<1x1x4xf32>,
    } else {
    }
    return
  }
  func.func @transform_0(%arg0: i32, %arg1: i32) -> (i32, i32, i32) {
    %c0_i32 = arith.constant 0 : i32
    %c0_i32_0 = arith.constant 0 : i32
    return %arg0, %arg1, %c0_i32 : i32, i32, i32
  }
  func.func @transform_1(%arg0: i32, %arg1: i32) -> (i32, i32) {
    %c0_i32 = arith.constant 0 : i32
    %c0_i32_0 = arith.constant 0 : i32
    %c0_i32_1 = arith.constant 0 : i32
    return %c0_i32, %c0_i32_0 : i32, i32
  }
  func.func @transform_2(%arg0: i32, %arg1: i32) -> (i32, i32) {
    %c0_i32 = arith.constant 0 : i32
    %c0_i32_0 = arith.constant 0 : i32
    %c0_i32_1 = arith.constant 0 : i32
    return %c0_i32, %c0_i32_0 : i32, i32
  }
  func.func @transform_3(%arg0: i32, %arg1: i32) -> (i32, i32) {
    %c0_i32 = arith.constant 0 : i32
    %c0_i32_0 = arith.constant 0 : i32
    %c0_i32_1 = arith.constant 0 : i32
    return %c0_i32, %c0_i32_0 : i32, i32
  }
  func.func @transform_4(%arg0: i32, %arg1: i32) -> (i32, i32) {
    %c0_i32 = arith.constant 0 : i32
    %c0_i32_0 = arith.constant 0 : i32
    %c0_i32_1 = arith.constant 0 : i32
    return %c0_i32, %c0_i32_0 : i32, i32
  }
  func.func @transform_5(%arg0: i32, %arg1: i32) -> (i32, i32) {
    %c0_i32 = arith.constant 0 : i32
    %c0_i32_0 = arith.constant 0 : i32
    %c0_i32_1 = arith.constant 0 : i32
    return %c0_i32, %c0_i32_0 : i32, i32
  }
  func.func @transform_6(%arg0: i32, %arg1: i32) -> (i32, i32, i32) {
    %c0_i32 = arith.constant 0 : i32
    %c0_i32_0 = arith.constant 0 : i32
    %c0_i32_1 = arith.constant 0 : i32
    return %arg0, %c0_i32, %c0_i32_0 : i32, i32, i32
  }
  func.func @transform_7(%arg0: i32, %arg1: i32) -> (i32, i32, i32) {
    %c0_i32 = arith.constant 0 : i32
    %c0_i32_0 = arith.constant 0 : i32
    %c0_i32_1 = arith.constant 0 : i32
    return %arg0, %c0_i32, %c0_i32_0 : i32, i32, i32
  }
}

</mosaic_0001>

<llo_original>
// kernel: tpu_custom_call.1
$region0: #{tpu_custom_call.1}
  #allocation0 [shape = 'u32[]', space=smem, size = 0x4, offset = 0x4, fixed_abs, tag = 'smem constant byte address 0x4 - core index']
  #allocation1 [shape = 'u32[72,128]{1,0:T(1,128)}', space=vmem, size = 0x9000, scoped, tag = 'internal scratch']
  #allocation2 [shape = 'f32[1,1]{1,0:T(1,128)}', space=vmem, size = 0x200, scoped, tag = 'scratch operand']
  #allocation3 [shape = 'f32[1,1]{1,0:T(1,128)}', space=vmem, size = 0x200, scoped, tag = 'scratch operand']
  #allocation4 [shape = 'f32[1,32]{1,0:T(1,128)}', space=vmem, size = 0x200, scoped, tag = 'scratch operand']
  %s0 = inlined_call_operand.vmem [shape: f32[2,8,32], index: 0, kind: input, shape index: {}]
  %s1 = inlined_call_operand.vmem [shape: f32[32,16], index: 1, kind: input, shape index: {}]
  %s2 = inlined_call_operand.vmem [shape: f32[1,16], index: 2, kind: input, shape index: {}]
  %s3 = inlined_call_operand.vmem [shape: f32[1,16], index: 3, kind: input, shape index: {}]
  %s4 = inlined_call_operand.vmem [shape: f32[32,4], index: 4, kind: input, shape index: {}]
  %s5 = inlined_call_operand.vmem [shape: f32[1,4], index: 5, kind: input, shape index: {}]
  %s6 = inlined_call_operand.hbm [shape: f32[2,1,32], index: 6, kind: output, shape index: {0}]
  %s7 = inlined_call_operand.hbm [shape: f32[2,1,4], index: 7, kind: output, shape index: {1}]
  %8 = xla_tuple %s6, %s7
  %s9 = sld [smem:[#allocation0]]
  $region73: #{tpu_custom_call.1} parent=0
    _
  %s11 = ssub.s32 1, %s9
  %s12 = scalar_select 0, %s11, %s9
  $region1: #{tpu_custom_call.1} parent=0
    #allocation5 [shape = 'u8[1024]{0}', space=vmem, size = 0x400, scoped, tag = 'output window, operand 0']
    #allocation6 [shape = 's32[2]{0}', space=sflag, size = 0x8, scoped, tag = 'scoped memory for tpu_custom_call.1']
    #allocation7 [shape = 'u8[1024]{0}', space=vmem, size = 0x400, scoped, tag = 'output window, operand 1']
    #allocation8 [shape = 's32[2]{0}', space=sflag, size = 0x8, scoped, tag = 'scoped memory for tpu_custom_call.1']
    %13 = vsyncpa [#allocation6], 0
    %s14 = scalar_lea.sflag [#allocation6], 1
    %15 = vsyncpa %s14, 0
    %16 = vsyncpa [#allocation8], 0
    %s17 = scalar_lea.sflag [#allocation8], 1
    %18 = vsyncpa %s17, 0
    loop: start=0, step=1, limit=4
    $region2: #{tpu_custom_call.1} parent=1 // loop_pre_header
      _
    $region3: #{tpu_custom_call.1} parent=1 // loop_header
      %s20 = sphi 0, %s24
      %p21 = scmp.ge.s32.totalorder %s20, 4
      %s27 = sphi 0, %s39
      %s28 = sphi 0, %s35
      %s29 = sphi 0, %s27
      %s30 = sphi 0, %s28
      %s31 = sphi 0, %s29
      %s32 = sphi 0, %s30
      %s44 = sphi 0, %s46
      %s47 = sphi 0, %s44
      %s48 = sphi 0, %s47
      %s64 = sphi 0, %s48
      %s68 = sphi 0, %s68
      %s70 = sphi 0, %s68
      %s71 = sphi 0, %s70
      %s85 = sphi 0, %s71
      %s89 = sphi 0, %s89
      %s91 = sphi 0, %s89
      %s92 = sphi 0, %s91
      %s106 = sphi 0, %s92
      %s110 = sphi 0, %s110
      %s112 = sphi 0, %s110
      %s113 = sphi 0, %s112
      %s127 = sphi 0, %s113
      %s131 = sphi 0, %s131
      %s133 = sphi 0, %s131
      %s134 = sphi 0, %s133
      %s148 = sphi 0, %s134
      %s152 = sphi 0, %s152
      %s154 = sphi 0, %s152
      %s155 = sphi 0, %s154
      %s169 = sphi 0, %s155
      %s175 = sphi 0, %s177
      %s178 = sphi 0, %s175
      %s179 = sphi 0, %s178
      %s195 = sphi 0, %s179
      %s201 = sphi 0, %s203
      %s204 = sphi 0, %s201
      %s205 = sphi 0, %s204
      %s221 = sphi 0, %s205
    $region4: #{tpu_custom_call.1} parent=1 // loop_header_branch
      %23 = sbr.rel (%p21) target = $region8
    $region5: #{tpu_custom_call.1} parent=1 // loop_body
      %s25 = ssub.s32 %s20, 1
      %s26 = ssub.s32 %s20, 2
      %s33 = sadd.s32 1, %s28
      %p34 = scmp.ge.s32.totalorder %s33, 1
      %s35 = scalar_select %p34, 0, %s33
      %s36 = sadd.s32 1, %s27
      %s37 = scalar_select %p34, %s36, %s27
      %p38 = scmp.ge.s32.totalorder %s37, 2
      %s39 = scalar_select %p38, 0, %s37
      %s40 = ssub.s32 %s27, %s39
      %s41 = ssub.s32 %s28, %s35
      %s42 = sor.u32 %s40, %s41
      %p43 = scmp.eq.s32.totalorder %s42, 0
      %s45 = sadd.s32 %s44, 1
      %s46 = scalar_select %p43, %s44, %s45
      %p49 = pneg %p43
      %p50 = scmp.eq.s32.totalorder %s20, 1
      %p51 = por %p49, %p50
      %p52 = scmp.ne.s32.totalorder %s44, %s47
      %p53 = scmp.eq.s32.totalorder %s20, 0
      %p54 = por %p52, %p53
      %p55 = scmp.ne.s32.totalorder %s44, %s47
      %p56 = scmp.eq.s32.totalorder %s25, 1
      %p57 = por %p55, %p56
      %p58 = scmp.ne.s32.totalorder %s47, %s48
      %p59 = scmp.eq.s32.totalorder %s25, 0
      %p60 = por %p58, %p59
      %p61 = scmp.ne.s32.totalorder %s47, %s48
      %p62 = scmp.eq.s32.totalorder %s26, 1
      %p63 = por %p61, %p62
      %p65 = scmp.ne.s32.totalorder %s48, %s64
      %p66 = scmp.eq.s32.totalorder %s26, 0
      %p67 = por %p65, %p66
      %s69 = sadd.s32 %s68, 1
      %p72 = scmp.eq.s32.totalorder %s20, 1
      %p73 = scmp.ne.s32.totalorder %s68, %s70
      %p74 = scmp.eq.s32.totalorder %s20, 0
      %p75 = por %p73, %p74
      %p76 = scmp.ne.s32.totalorder %s68, %s70
      %p77 = scmp.eq.s32.totalorder %s25, 1
      %p78 = por %p76, %p77
      %p79 = scmp.ne.s32.totalorder %s70, %s71
      %p80 = scmp.eq.s32.totalorder %s25, 0
      %p81 = por %p79, %p80
      %p82 = scmp.ne.s32.totalorder %s70, %s71
      %p83 = scmp.eq.s32.totalorder %s26, 1
      %p84 = por %p82, %p83
      %p86 = scmp.ne.s32.totalorder %s71, %s85
      %p87 = scmp.eq.s32.totalorder %s26, 0
      %p88 = por %p86, %p87
      %s90 = sadd.s32 %s89, 1
      %p93 = scmp.eq.s32.totalorder %s20, 1
      %p94 = scmp.ne.s32.totalorder %s89, %s91
      %p95 = scmp.eq.s32.totalorder %s20, 0
      %p96 = por %p94, %p95
      %p97 = scmp.ne.s32.totalorder %s89, %s91
      %p98 = scmp.eq.s32.totalorder %s25, 1
      %p99 = por %p97, %p98
      %p100 = scmp.ne.s32.totalorder %s91, %s92
      %p101 = scmp.eq.s32.totalorder %s25, 0
      %p102 = por %p100, %p101
      %p103 = scmp.ne.s32.totalorder %s91, %s92
      %p104 = scmp.eq.s32.totalorder %s26, 1
      %p105 = por %p103, %p104
      %p107 = scmp.ne.s32.totalorder %s92, %s106
      %p108 = scmp.eq.s32.totalorder %s26, 0
      %p109 = por %p107, %p108
      %s111 = sadd.s32 %s110, 1
      %p114 = scmp.eq.s32.totalorder %s20, 1
      %p115 = scmp.ne.s32.totalorder %s110, %s112
      %p116 = scmp.eq.s32.totalorder %s20, 0
      %p117 = por %p115, %p116
      %p118 = scmp.ne.s32.totalorder %s110, %s112
      %p119 = scmp.eq.s32.totalorder %s25, 1
      %p120 = por %p118, %p119
      %p121 = scmp.ne.s32.totalorder %s112, %s113
      %p122 = scmp.eq.s32.totalorder %s25, 0
      %p123 = por %p121, %p122
      %p124 = scmp.ne.s32.totalorder %s112, %s113
      %p125 = scmp.eq.s32.totalorder %s26, 1
      %p126 = por %p124, %p125
      %p128 = scmp.ne.s32.totalorder %s113, %s127
      %p129 = scmp.eq.s32.totalorder %s26, 0
      %p130 = por %p128, %p129
      %s132 = sadd.s32 %s131, 1
      %p135 = scmp.eq.s32.totalorder %s20, 1
      %p136 = scmp.ne.s32.totalorder %s131, %s133
      %p137 = scmp.eq.s32.totalorder %s20, 0
      %p138 = por %p136, %p137
      %p139 = scmp.ne.s32.totalorder %s131, %s133
      %p140 = scmp.eq.s32.totalorder %s25, 1
      %p141 = por %p139, %p140
      %p142 = scmp.ne.s32.totalorder %s133, %s134
      %p143 = scmp.eq.s32.totalorder %s25, 0
      %p144 = por %p142, %p143
      %p145 = scmp.ne.s32.totalorder %s133, %s134
      %p146 = scmp.eq.s32.totalorder %s26, 1
      %p147 = por %p145, %p146
      %p149 = scmp.ne.s32.totalorder %s134, %s148
      %p150 = scmp.eq.s32.totalorder %s26, 0
      %p151 = por %p149, %p150
      %s153 = sadd.s32 %s152, 1
      %p156 = scmp.eq.s32.totalorder %s20, 1
      %p157 = scmp.ne.s32.totalorder %s152, %s154
      %p158 = scmp.eq.s32.totalorder %s20, 0
      %p159 = por %p157, %p158
      %p160 = scmp.ne.s32.totalorder %s152, %s154
      %p161 = scmp.eq.s32.totalorder %s25, 1
      %p162 = por %p160, %p161
      %p163 = scmp.ne.s32.totalorder %s154, %s155
      %p164 = scmp.eq.s32.totalorder %s25, 0
      %p165 = por %p163, %p164
      %p166 = scmp.ne.s32.totalorder %s154, %s155
      %p167 = scmp.eq.s32.totalorder %s26, 1
      %p168 = por %p166, %p167
      %p170 = scmp.ne.s32.totalorder %s155, %s169
      %p171 = scmp.eq.s32.totalorder %s26, 0
      %p172 = por %p170, %p171
      %s173 = ssub.s32 %s27, %s39
      %p174 = scmp.eq.s32.totalorder %s173, 0
      %s176 = sadd.s32 %s175, 1
      %s177 = scalar_select %p174, %s175, %s176
      %p180 = pneg %p174
      %p181 = scmp.eq.s32.totalorder %s20, 1
      %p182 = por %p180, %p181
      %p183 = scmp.ne.s32.totalorder %s175, %s178
      %p184 = scmp.eq.s32.totalorder %s20, 0
      %p185 = por %p183, %p184
      %p186 = scmp.ne.s32.totalorder %s175, %s178
      %p187 = scmp.eq.s32.totalorder %s25, 1
      %p188 = por %p186, %p187
      %p189 = scmp.ne.s32.totalorder %s178, %s179
      %p190 = scmp.eq.s32.totalorder %s25, 0
      %p191 = por %p189, %p190
      %p192 = scmp.ne.s32.totalorder %s178, %s179
      %p193 = scmp.eq.s32.totalorder %s26, 1
      %p194 = por %p192, %p193
      %p196 = scmp.ne.s32.totalorder %s179, %s195
      %p197 = scmp.eq.s32.totalorder %s26, 0
      %p198 = por %p196, %p197
      %s199 = ssub.s32 %s27, %s39
      %p200 = scmp.eq.s32.totalorder %s199, 0
      %s202 = sadd.s32 %s201, 1
      %s203 = scalar_select %p200, %s201, %s202
      %p206 = pneg %p200
      %p207 = scmp.eq.s32.totalorder %s20, 1
      %p208 = por %p206, %p207
      %p209 = scmp.ne.s32.totalorder %s201, %s204
      %p210 = scmp.eq.s32.totalorder %s20, 0
      %p211 = por %p209, %p210
      %p212 = scmp.ne.s32.totalorder %s201, %s204
      %p213 = scmp.eq.s32.totalorder %s25, 1
      %p214 = por %p212, %p213
      %p215 = scmp.ne.s32.totalorder %s204, %s205
      %p216 = scmp.eq.s32.totalorder %s25, 0
      %p217 = por %p215, %p216
      %p218 = scmp.ne.s32.totalorder %s204, %s205
      %p219 = scmp.eq.s32.totalorder %s26, 1
      %p220 = por %p218, %p219
      %p222 = scmp.ne.s32.totalorder %s205, %s221
      %p223 = scmp.eq.s32.totalorder %s26, 0
      %p224 = por %p222, %p223
      %p225 = scmp.le.s32.totalorder 1, %s20
      %p226 = scmp.lt.s32.totalorder %s20, 3
      %p227 = pnand %p225, %p226
      %p228 = pneg %p227
      // Predicated region
      $region9: #{tpu_custom_call.1} parent=5 // pred_check
        _
      $region10: #{tpu_custom_call.1} parent=5 // pred_check_branch
        %230 = sbr.rel (%p227) target = $region12
      $region11: #{tpu_custom_call.1} parent=5 // pred_region
        %s231 = ssub.s32 %s20, 1
        // Predicated region
        $region13: #{tpu_custom_call.1} parent=11 // pred_check
          %p232 = pneg %p81
        $region14: #{tpu_custom_call.1} parent=11 // pred_check_branch
          %234 = sbr.rel (%p232) target = $region16
        $region15: #{tpu_custom_call.1} parent=11 // pred_region
          _
        $region16: #{tpu_custom_call.1} parent=11 // pred_fallthru
          _
        // Predicated region
        $region17: #{tpu_custom_call.1} parent=11 // pred_check
          %p235 = pneg %p102
        $region18: #{tpu_custom_call.1} parent=11 // pred_check_branch
          %237 = sbr.rel (%p235) target = $region20
        $region19: #{tpu_custom_call.1} parent=11 // pred_region
          _
        $region20: #{tpu_custom_call.1} parent=11 // pred_fallthru
          _
        // Predicated region
        $region21: #{tpu_custom_call.1} parent=11 // pred_check
          %p238 = pneg %p123
        $region22: #{tpu_custom_call.1} parent=11 // pred_check_branch
          %240 = sbr.rel (%p238) target = $region24
        $region23: #{tpu_custom_call.1} parent=11 // pred_region
          _
        $region24: #{tpu_custom_call.1} parent=11 // pred_fallthru
          _
        // Predicated region
        $region25: #{tpu_custom_call.1} parent=11 // pred_check
          %p241 = pneg %p144
        $region26: #{tpu_custom_call.1} parent=11 // pred_check_branch
          %243 = sbr.rel (%p241) target = $region28
        $region27: #{tpu_custom_call.1} parent=11 // pred_region
          _
        $region28: #{tpu_custom_call.1} parent=11 // pred_fallthru
          _
        // Predicated region
        $region29: #{tpu_custom_call.1} parent=11 // pred_check
          %p244 = pneg %p165
        $region30: #{tpu_custom_call.1} parent=11 // pred_check_branch
          %246 = sbr.rel (%p244) target = $region32
        $region31: #{tpu_custom_call.1} parent=11 // pred_region
          _
        $region32: #{tpu_custom_call.1} parent=11 // pred_fallthru
          _
      $region12: #{tpu_custom_call.1} parent=5 // pred_fallthru
        _
      %p247 = scmp.lt.s32.totalorder %s20, 2
      // Predicated region
      $region33: #{tpu_custom_call.1} parent=5 // pred_check
        %p248 = pneg %p247
      $region34: #{tpu_custom_call.1} parent=5 // pred_check_branch
        %250 = sbr.rel (%p248) target = $region36
      $region35: #{tpu_custom_call.1} parent=5 // pred_region
        // Predicated region
        $region37: #{tpu_custom_call.1} parent=35 // pred_check
          %p251 = pneg %p54
        $region38: #{tpu_custom_call.1} parent=35 // pred_check_branch
          %253 = sbr.rel (%p251) target = $region40
        $region39: #{tpu_custom_call.1} parent=35 // pred_region
          %p254 = scmp.lt.s32.totalorder %s27, 1
          %s255 = scalar_select %p254, %s27, 1
          %p256 = scmp.lt.s32.totalorder %s28, 0
          %s257 = scalar_select %p256, %s28, 0
          %s258 = sadd.s32 %s257, %s255
          %s259 = smul.addr %s258, 8
          %s260 = scalar_lea.vmem %s0, %s259
        $region40: #{tpu_custom_call.1} parent=35 // pred_fallthru
          _
      $region36: #{tpu_custom_call.1} parent=5 // pred_fallthru
        _
      %p261 = scmp.le.s32.totalorder 1, %s20
      %p262 = scmp.lt.s32.totalorder %s20, 3
      %p263 = pnand %p261, %p262
      %p264 = pneg %p263
      // Predicated region
      $region41: #{tpu_custom_call.1} parent=5 // pred_check
        _
      $region42: #{tpu_custom_call.1} parent=5 // pred_check_branch
        %266 = sbr.rel (%p263) target = $region44
      $region43: #{tpu_custom_call.1} parent=5 // pred_region
        %s267 = ssub.s32 %s20, 1
        %p268 = scmp.lt.s32.totalorder %s29, 1
        %s269 = scalar_select %p268, %s29, 1
        %p270 = scmp.lt.s32.totalorder %s30, 0
        %s271 = scalar_select %p270, %s30, 0
        %s272 = sadd.s32 %s271, %s269
        %s273 = smul.addr %s272, 8
        %s274 = scalar_lea.vmem %s0, %s273
        %p275 = pneg %p60
        %p276 = pneg %p57
        %p277 = pneg %p81
        %p278 = pneg %p78
        %p279 = pneg %p102
        %p280 = pneg %p99
        %p281 = pneg %p123
        %p282 = pneg %p120
        %p283 = pneg %p144
        %p284 = pneg %p141
        %p285 = pneg %p165
        %p286 = pneg %p162
        %p287 = pneg %p191
        %p288 = pneg %p188
        %s289 = sand.u32 %s178, 1
        %s290 = scalar_lea.sflag [#allocation6], %s289
        %s291 = sand.u32 %s178, 1
        %s292 = scalar_lea.vmem [#allocation5], %s291
        %p293 = pneg %p217
        %p294 = pneg %p214
        %s295 = sand.u32 %s204, 1
        %s296 = scalar_lea.sflag [#allocation8], %s295
        %s297 = sand.u32 %s204, 1
        %s298 = scalar_lea.vmem [#allocation7], %s297
        %p299 = scmp.lt.s32.totalorder %s29, 1
        %s300 = scalar_select %p299, %s29, 1
        %p301 = scmp.lt.s32.totalorder %s30, 0
        %s302 = scalar_select %p301, %s30, 0
        %s303 = sadd.s32 %s302, %s300
        %s304 = smul.addr %s303, 8
        %s305 = scalar_lea.vmem %s0, %s304
        %p306 = scmp.eq.s32.totalorder %s30, 0
        // Predicated region
        $region45: #{tpu_custom_call.1} parent=43 // pred_check
          %p307 = pneg %p306
        $region46: #{tpu_custom_call.1} parent=43 // pred_check_branch
          %309 = sbr.rel (%p307) target = $region48
        $region47: #{tpu_custom_call.1} parent=43 // pred_region
          %vm310 = vcmask 0
          %311 = vst.msk [vmem:[#allocation2] sm:$0x1] %vm310, -1e+30
          %312 = vst.msk [vmem:[#allocation3] sm:$0x1] %vm310, 0.0
          %vm313 = vcmask 253952
          %314 = vst.msk [vmem:[#allocation4] sm:$0x1] %vm313, 0.0
        $region48: #{tpu_custom_call.1} parent=43 // pred_fallthru
          _
        %v315 = vld [vmem:[%s305] sm:$0xff]
        %v316 = vld [vmem:[%s1] sm:$0xff]
        %v317 = vld [vmem:[%s1 + $0x8] sm:$0xff]
        %v318 = vld [vmem:[%s1 + $0x10] sm:$0xff]
        %v319 = vld [vmem:[%s1 + $0x18] sm:$0xff]
        %v320 = vld [vmem:[%s2] sm:$0x1]
        %v322 = vperm.slane %v320, 0
        %vm324 = vcmask 261120
        %v326 = vsel %vm324, %v315, 0
        %328 = vmatpush.msra.mxu0 0.0
        %329 = vmatpush.msra.mxu0 0.0
        %330 = vmatpush.msra.mxu0 0.0
        %331 = vmatpush.msra.mxu0 0.0
        %332 = vmatpush.msra.mxu0 0.0
        %333 = vmatpush.msra.mxu0 0.0
        %334 = vmatpush.msra.mxu0 0.0
        %335 = vmatpush.msra.mxu0 0.0
        %336 = vmatpush.msra.mxu0 0.0
        %337 = vmatpush.msra.mxu0 0.0
        %338 = vmatpush.msra.mxu0 0.0
        %339 = vmatpush.msra.mxu0 0.0
        %v340 = vand.u32 %v319, 4294901760
        %341 = vmatpush.msra.mxu0 %v340
        %v342 = vand.u32 %v318, 4294901760
        %343 = vmatpush.msra.mxu0 %v342
        %v344 = vand.u32 %v317, 4294901760
        %345 = vmatpush.msra.mxu0 %v344
        %v346 = vand.u32 %v316, 4294901760
        %347 = vmatpush.msra.mxu0 %v346
        %v348 = vand.u32 %v326, 4294901760
        %v349 = vsub.f32 %v326, %v348
        %v350 = vand.u32 %v349, 4294901760
        %v351 = vsub.f32 %v349, %v350
        %v352 = vand.u32 %v351, 4294901760
        %353 = vmatmul.f32.gmra.mxu0 %v352
        %v354 = vpop.f32.mrf.mxu0
        %v355 = vadd.f32 %v322, %v354
        %356 = vdwg.mxu0
        %357 = vmatpush.msra.mxu0 0.0
        %358 = vmatpush.msra.mxu0 0.0
        %359 = vmatpush.msra.mxu0 0.0
        %360 = vmatpush.msra.mxu0 0.0
        %361 = vmatpush.msra.mxu0 0.0
        %362 = vmatpush.msra.mxu0 0.0
        %363 = vmatpush.msra.mxu0 0.0
        %364 = vmatpush.msra.mxu0 0.0
        %365 = vmatpush.msra.mxu0 0.0
        %366 = vmatpush.msra.mxu0 0.0
        %367 = vmatpush.msra.mxu0 0.0
        %368 = vmatpush.msra.mxu0 0.0
        %v369 = vand.u32 %v319, 4294901760
        %v370 = vsub.f32 %v319, %v369
        %v371 = vand.u32 %v370, 4294901760
        %v372 = vsub.f32 %v370, %v371
        %v373 = vand.u32 %v372, 4294901760
        %374 = vmatpush.msra.mxu0 %v373
        %v375 = vand.u32 %v318, 4294901760
        %v376 = vsub.f32 %v318, %v375
        %v377 = vand.u32 %v376, 4294901760
        %v378 = vsub.f32 %v376, %v377
        %v379 = vand.u32 %v378, 4294901760
        %380 = vmatpush.msra.mxu0 %v379
        %v381 = vand.u32 %v317, 4294901760
        %v382 = vsub.f32 %v317, %v381
        %v383 = vand.u32 %v382, 4294901760
        %v384 = vsub.f32 %v382, %v383
        %v385 = vand.u32 %v384, 4294901760
        %386 = vmatpush.msra.mxu0 %v385
        %v387 = vand.u32 %v316, 4294901760
        %v388 = vsub.f32 %v316, %v387
        %v389 = vand.u32 %v388, 4294901760
        %v390 = vsub.f32 %v388, %v389
        %v391 = vand.u32 %v390, 4294901760
        %392 = vmatpush.msra.mxu0 %v391
        %v393 = vand.u32 %v326, 4294901760
        %394 = vmatmul.f32.gmra.mxu0 %v393
        %v395 = vpop.f32.mrf.mxu0
        %v396 = vadd.f32 %v355, %v395
        %397 = vdwg.mxu0
        %398 = vmatpush.msra.mxu0 0.0
        %399 = vmatpush.msra.mxu0 0.0
        %400 = vmatpush.msra.mxu0 0.0
        %401 = vmatpush.msra.mxu0 0.0
        %402 = vmatpush.msra.mxu0 0.0
        %403 = vmatpush.msra.mxu0 0.0
        %404 = vmatpush.msra.mxu0 0.0
        %405 = vmatpush.msra.mxu0 0.0
        %406 = vmatpush.msra.mxu0 0.0
        %407 = vmatpush.msra.mxu0 0.0
        %408 = vmatpush.msra.mxu0 0.0
        %409 = vmatpush.msra.mxu0 0.0
        %v410 = vand.u32 %v319, 4294901760
        %v411 = vsub.f32 %v319, %v410
        %412 = vmatpush.msra.mxu0 %v411
        %v413 = vand.u32 %v318, 4294901760
        %v414 = vsub.f32 %v318, %v413
        %415 = vmatpush.msra.mxu0 %v414
        %v416 = vand.u32 %v317, 4294901760
        %v417 = vsub.f32 %v317, %v416
        %418 = vmatpush.msra.mxu0 %v417
        %v419 = vand.u32 %v316, 4294901760
        %v420 = vsub.f32 %v316, %v419
        %421 = vmatpush.msra.mxu0 %v420
        %v422 = vand.u32 %v326, 4294901760
        %v423 = vsub.f32 %v326, %v422
        %424 = vmatmul.f32.gmra.mxu0 %v423
        %v425 = vpop.f32.mrf.mxu0
        %v426 = vadd.f32 %v396, %v425
        %427 = vdwg.mxu0
        %428 = vmatpush.msra.mxu0 0.0
        %429 = vmatpush.msra.mxu0 0.0
        %430 = vmatpush.msra.mxu0 0.0
        %431 = vmatpush.msra.mxu0 0.0
        %432 = vmatpush.msra.mxu0 0.0
        %433 = vmatpush.msra.mxu0 0.0
        %434 = vmatpush.msra.mxu0 0.0
        %435 = vmatpush.msra.mxu0 0.0
        %436 = vmatpush.msra.mxu0 0.0
        %437 = vmatpush.msra.mxu0 0.0
        %438 = vmatpush.msra.mxu0 0.0
        %439 = vmatpush.msra.mxu0 0.0
        %v440 = vand.u32 %v319, 4294901760
        %441 = vmatpush.msra.mxu0 %v440
        %v442 = vand.u32 %v318, 4294901760
        %443 = vmatpush.msra.mxu0 %v442
        %v444 = vand.u32 %v317, 4294901760
        %445 = vmatpush.msra.mxu0 %v444
        %v446 = vand.u32 %v316, 4294901760
        %447 = vmatpush.msra.mxu0 %v446
        %v448 = vand.u32 %v326, 4294901760
        %v449 = vsub.f32 %v326, %v448
        %v450 = vand.u32 %v449, 4294901760
        %451 = vmatmul.f32.gmra.mxu0 %v450
        %v452 = vpop.f32.mrf.mxu0
        %v453 = vadd.f32 %v426, %v452
        %454 = vdwg.mxu0
        %455 = vmatpush.msra.mxu0 0.0
        %456 = vmatpush.msra.mxu0 0.0
        %457 = vmatpush.msra.mxu0 0.0
        %458 = vmatpush.msra.mxu0 0.0
        %459 = vmatpush.msra.mxu0 0.0
        %460 = vmatpush.msra.mxu0 0.0
        %461 = vmatpush.msra.mxu0 0.0
        %462 = vmatpush.msra.mxu0 0.0
        %463 = vmatpush.msra.mxu0 0.0
        %464 = vmatpush.msra.mxu0 0.0
        %465 = vmatpush.msra.mxu0 0.0
        %466 = vmatpush.msra.mxu0 0.0
        %v467 = vand.u32 %v319, 4294901760
        %v468 = vsub.f32 %v319, %v467
        %v469 = vand.u32 %v468, 4294901760
        %470 = vmatpush.msra.mxu0 %v469
        %v471 = vand.u32 %v318, 4294901760
        %v472 = vsub.f32 %v318, %v471
        %v473 = vand.u32 %v472, 4294901760
        %474 = vmatpush.msra.mxu0 %v473
        %v475 = vand.u32 %v317, 4294901760
        %v476 = vsub.f32 %v317, %v475
        %v477 = vand.u32 %v476, 4294901760
        %478 = vmatpush.msra.mxu0 %v477
        %v479 = vand.u32 %v316, 4294901760
        %v480 = vsub.f32 %v316, %v479
        %v481 = vand.u32 %v480, 4294901760
        %482 = vmatpush.msra.mxu0 %v481
        %v483 = vand.u32 %v326, 4294901760
        %484 = vmatmul.f32.gmra.mxu0 %v483
        %v485 = vpop.f32.mrf.mxu0
        %v486 = vadd.f32 %v453, %v485
        %487 = vdwg.mxu0
        %488 = vmatpush.msra.mxu0 0.0
        %489 = vmatpush.msra.mxu0 0.0
        %490 = vmatpush.msra.mxu0 0.0
        %491 = vmatpush.msra.mxu0 0.0
        %492 = vmatpush.msra.mxu0 0.0
        %493 = vmatpush.msra.mxu0 0.0
        %494 = vmatpush.msra.mxu0 0.0
        %495 = vmatpush.msra.mxu0 0.0
        %496 = vmatpush.msra.mxu0 0.0
        %497 = vmatpush.msra.mxu0 0.0
        %498 = vmatpush.msra.mxu0 0.0
        %499 = vmatpush.msra.mxu0 0.0
        %v500 = vand.u32 %v319, 4294901760
        %501 = vmatpush.msra.mxu0 %v500
        %v502 = vand.u32 %v318, 4294901760
        %503 = vmatpush.msra.mxu0 %v502
        %v504 = vand.u32 %v317, 4294901760
        %505 = vmatpush.msra.mxu0 %v504
        %v506 = vand.u32 %v316, 4294901760
        %507 = vmatpush.msra.mxu0 %v506
        %v508 = vand.u32 %v326, 4294901760
        %509 = vmatmul.f32.gmra.mxu0 %v508
        %v510 = vpop.f32.mrf.mxu0
        %v511 = vadd.f32 %v486, %v510
        %512 = vdwg.mxu0
        %v513 = vtanh.pop %v511
        %v514 = vld [vmem:[%s3] sm:$0x1]
        %v516 = vperm.slane %v514, 0
        %v518 = vmul.f32 %v513, %v516
        %vm519 = vcmask 130048
        %v520 = vsel %vm519, %v518, 0.0
        %521 = vadd.xlane.f32.xlu0 %v520
        %v522 = vpop.xlane.xlu0 %521
        %v523 = vld [vmem:[#allocation2] sm:$0x1]
        %v524 = vrot.slane %v522, 4
        %v525 = vmax.f32 %v522, %v524
        %v526 = vrot.slane %v525, 2
        %v527 = vmax.f32 %v525, %v526
        %v528 = vrot.slane %v527, 1
        %v529 = vmax.f32 %v527, %v528
        %v530 = vmax.f32 %v523, %v529
        %v531 = vsub.f32 %v523, %v530
        %v532 = vmul.f32 %v531, 1.442695
        %v533 = vpow.pop %v532
        %v535 = vperm.slane %v530, 0
        %v537 = vsub.f32 %v522, %v535
        %v538 = vmul.f32 %v537, 1.442695
        %v539 = vpow.pop %v538
        %v540 = vld [vmem:[#allocation3] sm:$0x1]
        %v541 = vmul.f32 %v533, %v540
        %vm542 = vcmask 7168
        %v543 = vsel %vm542, %v539, 0.0
        %v544 = vrot.slane %v543, 4
        %v545 = vadd.f32 %v543, %v544
        %v546 = vrot.slane %v545, 2
        %v547 = vadd.f32 %v545, %v546
        %v548 = vrot.slane %v547, 1
        %v549 = vadd.f32 %v547, %v548
        %v550 = vadd.f32 %v541, %v549
        %vm551 = vcmask 0
        %552 = vst.msk [vmem:[#allocation3] sm:$0x1] %vm551, %v550
        %v553 = vld [vmem:[#allocation4] sm:$0x1]
        %555 = vset.pattern.permute.xlu0 0
        %556 = vperm.xlu0 %555, %v533
        %v557 = vpop.permute.xlu0 %556
        %v559 = vperm.slane %v557, 0
        %v560 = vmul.f32 %v559, %v553
        %562 = vset.pattern.permute.xlu0 0
        %563 = vperm.xlu0 %562, %v539
        %v564 = vpop.permute.xlu0 %563
        %v566 = vmul.f32 %v564, %v315
        %v567 = vsel %vm324, %v566, 0.0
        %v568 = vrot.slane %v567, 4
        %v569 = vadd.f32 %v567, %v568
        %v570 = vrot.slane %v569, 2
        %v571 = vadd.f32 %v569, %v570
        %v572 = vrot.slane %v571, 1
        %v573 = vadd.f32 %v571, %v572
        %v574 = vadd.f32 %v560, %v573
        %vm575 = vcmask 253952
        %576 = vst.msk [vmem:[#allocation4] sm:$0x1] %vm575, %v574
        %577 = vst.msk [vmem:[#allocation2] sm:$0x1] %vm551, %v530
        // Predicated region
        $region49: #{tpu_custom_call.1} parent=43 // pred_check
          %p578 = pneg %p306
        $region50: #{tpu_custom_call.1} parent=43 // pred_check_branch
          %580 = sbr.rel (%p578) target = $region52
        $region51: #{tpu_custom_call.1} parent=43 // pred_region
          %v581 = vld [vmem:[#allocation3] sm:$0x1]
          %v582 = vrcp.pop %v581
          %v583 = vmul.f32 %v581, %v582
          %v584 = vsub.f32 2.0, %v583
          %v585 = vmul.f32 %v582, %v584
          %v586 = vld [vmem:[#allocation4] sm:$0x1]
          %588 = vset.pattern.permute.xlu0 0
          %589 = vperm.xlu0 %588, %v585
          %v590 = vpop.permute.xlu0 %589
          %v592 = vperm.slane %v590, 0
          %v593 = vmul.f32 %v586, %v592
          %594 = vst.msk [vmem:[%s292] sm:$0x1] %vm575, %v593
          %v595 = vld [vmem:[%s4] sm:$0xff]
          %v596 = vld [vmem:[%s4 + $0x8] sm:$0xff]
          %v597 = vld [vmem:[%s4 + $0x10] sm:$0xff]
          %v598 = vld [vmem:[%s4 + $0x18] sm:$0xff]
          %v599 = vld [vmem:[%s5] sm:$0x1]
          %v601 = vsel %vm324, %v593, 0
          %603 = vmatpush.msra.mxu0 0.0
          %604 = vmatpush.msra.mxu0 0.0
          %605 = vmatpush.msra.mxu0 0.0
          %606 = vmatpush.msra.mxu0 0.0
          %607 = vmatpush.msra.mxu0 0.0
          %608 = vmatpush.msra.mxu0 0.0
          %609 = vmatpush.msra.mxu0 0.0
          %610 = vmatpush.msra.mxu0 0.0
          %611 = vmatpush.msra.mxu0 0.0
          %612 = vmatpush.msra.mxu0 0.0
          %613 = vmatpush.msra.mxu0 0.0
          %614 = vmatpush.msra.mxu0 0.0
          %v615 = vand.u32 %v598, 4294901760
          %616 = vmatpush.msra.mxu0 %v615
          %v617 = vand.u32 %v597, 4294901760
          %618 = vmatpush.msra.mxu0 %v617
          %v619 = vand.u32 %v596, 4294901760
          %620 = vmatpush.msra.mxu0 %v619
          %v621 = vand.u32 %v595, 4294901760
          %622 = vmatpush.msra.mxu0 %v621
          %v623 = vand.u32 %v601, 4294901760
          %v624 = vsub.f32 %v601, %v623
          %v625 = vand.u32 %v624, 4294901760
          %v626 = vsub.f32 %v624, %v625
          %v627 = vand.u32 %v626, 4294901760
          %628 = vmatmul.f32.gmra.mxu0 %v627
          %v629 = vpop.f32.mrf.mxu0
          %v630 = vadd.f32 %v599, %v629
          %631 = vdwg.mxu0
          %632 = vmatpush.msra.mxu0 0.0
          %633 = vmatpush.msra.mxu0 0.0
          %634 = vmatpush.msra.mxu0 0.0
          %635 = vmatpush.msra.mxu0 0.0
          %636 = vmatpush.msra.mxu0 0.0
          %637 = vmatpush.msra.mxu0 0.0
          %638 = vmatpush.msra.mxu0 0.0
          %639 = vmatpush.msra.mxu0 0.0
          %640 = vmatpush.msra.mxu0 0.0
          %641 = vmatpush.msra.mxu0 0.0
          %642 = vmatpush.msra.mxu0 0.0
          %643 = vmatpush.msra.mxu0 0.0
          %v644 = vand.u32 %v598, 4294901760
          %v645 = vsub.f32 %v598, %v644
          %v646 = vand.u32 %v645, 4294901760
          %v647 = vsub.f32 %v645, %v646
          %v648 = vand.u32 %v647, 4294901760
          %649 = vmatpush.msra.mxu0 %v648
          %v650 = vand.u32 %v597, 4294901760
          %v651 = vsub.f32 %v597, %v650
          %v652 = vand.u32 %v651, 4294901760
          %v653 = vsub.f32 %v651, %v652
          %v654 = vand.u32 %v653, 4294901760
          %655 = vmatpush.msra.mxu0 %v654
          %v656 = vand.u32 %v596, 4294901760
          %v657 = vsub.f32 %v596, %v656
          %v658 = vand.u32 %v657, 4294901760
          %v659 = vsub.f32 %v657, %v658
          %v660 = vand.u32 %v659, 4294901760
          %661 = vmatpush.msra.mxu0 %v660
          %v662 = vand.u32 %v595, 4294901760
          %v663 = vsub.f32 %v595, %v662
          %v664 = vand.u32 %v663, 4294901760
          %v665 = vsub.f32 %v663, %v664
          %v666 = vand.u32 %v665, 4294901760
          %667 = vmatpush.msra.mxu0 %v666
          %v668 = vand.u32 %v601, 4294901760
          %669 = vmatmul.f32.gmra.mxu0 %v668
          %v670 = vpop.f32.mrf.mxu0
          %v671 = vadd.f32 %v630, %v670
          %672 = vdwg.mxu0
          %673 = vmatpush.msra.mxu0 0.0
          %674 = vmatpush.msra.mxu0 0.0
          %675 = vmatpush.msra.mxu0 0.0
          %676 = vmatpush.msra.mxu0 0.0
          %677 = vmatpush.msra.mxu0 0.0
          %678 = vmatpush.msra.mxu0 0.0
          %679 = vmatpush.msra.mxu0 0.0
          %680 = vmatpush.msra.mxu0 0.0
          %681 = vmatpush.msra.mxu0 0.0
          %682 = vmatpush.msra.mxu0 0.0
          %683 = vmatpush.msra.mxu0 0.0
          %684 = vmatpush.msra.mxu0 0.0
          %v685 = vand.u32 %v598, 4294901760
          %v686 = vsub.f32 %v598, %v685
          %687 = vmatpush.msra.mxu0 %v686
          %v688 = vand.u32 %v597, 4294901760
          %v689 = vsub.f32 %v597, %v688
          %690 = vmatpush.msra.mxu0 %v689
          %v691 = vand.u32 %v596, 4294901760
          %v692 = vsub.f32 %v596, %v691
          %693 = vmatpush.msra.mxu0 %v692
          %v694 = vand.u32 %v595, 4294901760
          %v695 = vsub.f32 %v595, %v694
          %696 = vmatpush.msra.mxu0 %v695
          %v697 = vand.u32 %v601, 4294901760
          %v698 = vsub.f32 %v601, %v697
          %699 = vmatmul.f32.gmra.mxu0 %v698
          %v700 = vpop.f32.mrf.mxu0
          %v701 = vadd.f32 %v671, %v700
          %702 = vdwg.mxu0
          %703 = vmatpush.msra.mxu0 0.0
          %704 = vmatpush.msra.mxu0 0.0
          %705 = vmatpush.msra.mxu0 0.0
          %706 = vmatpush.msra.mxu0 0.0
          %707 = vmatpush.msra.mxu0 0.0
          %708 = vmatpush.msra.mxu0 0.0
          %709 = vmatpush.msra.mxu0 0.0
          %710 = vmatpush.msra.mxu0 0.0
          %711 = vmatpush.msra.mxu0 0.0
          %712 = vmatpush.msra.mxu0 0.0
          %713 = vmatpush.msra.mxu0 0.0
          %714 = vmatpush.msra.mxu0 0.0
          %v715 = vand.u32 %v598, 4294901760
          %716 = vmatpush.msra.mxu0 %v715
          %v717 = vand.u32 %v597, 4294901760
          %718 = vmatpush.msra.mxu0 %v717
          %v719 = vand.u32 %v596, 4294901760
          %720 = vmatpush.msra.mxu0 %v719
          %v721 = vand.u32 %v595, 4294901760
          %722 = vmatpush.msra.mxu0 %v721
          %v723 = vand.u32 %v601, 4294901760
          %v724 = vsub.f32 %v601, %v723
          %v725 = vand.u32 %v724, 4294901760
          %726 = vmatmul.f32.gmra.mxu0 %v725
          %v727 = vpop.f32.mrf.mxu0
          %v728 = vadd.f32 %v701, %v727
          %729 = vdwg.mxu0
          %730 = vmatpush.msra.mxu0 0.0
          %731 = vmatpush.msra.mxu0 0.0
          %732 = vmatpush.msra.mxu0 0.0
          %733 = vmatpush.msra.mxu0 0.0
          %734 = vmatpush.msra.mxu0 0.0
          %735 = vmatpush.msra.mxu0 0.0
          %736 = vmatpush.msra.mxu0 0.0
          %737 = vmatpush.msra.mxu0 0.0
          %738 = vmatpush.msra.mxu0 0.0
          %739 = vmatpush.msra.mxu0 0.0
          %740 = vmatpush.msra.mxu0 0.0
          %741 = vmatpush.msra.mxu0 0.0
          %v742 = vand.u32 %v598, 4294901760
          %v743 = vsub.f32 %v598, %v742
          %v744 = vand.u32 %v743, 4294901760
          %745 = vmatpush.msra.mxu0 %v744
          %v746 = vand.u32 %v597, 4294901760
          %v747 = vsub.f32 %v597, %v746
          %v748 = vand.u32 %v747, 4294901760
          %749 = vmatpush.msra.mxu0 %v748
          %v750 = vand.u32 %v596, 4294901760
          %v751 = vsub.f32 %v596, %v750
          %v752 = vand.u32 %v751, 4294901760
          %753 = vmatpush.msra.mxu0 %v752
          %v754 = vand.u32 %v595, 4294901760
          %v755 = vsub.f32 %v595, %v754
          %v756 = vand.u32 %v755, 4294901760
          %757 = vmatpush.msra.mxu0 %v756
          %v758 = vand.u32 %v601, 4294901760
          %759 = vmatmul.f32.gmra.mxu0 %v758
          %v760 = vpop.f32.mrf.mxu0
          %v761 = vadd.f32 %v728, %v760
          %762 = vdwg.mxu0
          %763 = vmatpush.msra.mxu0 0.0
          %764 = vmatpush.msra.mxu0 0.0
          %765 = vmatpush.msra.mxu0 0.0
          %766 = vmatpush.msra.mxu0 0.0
          %767 = vmatpush.msra.mxu0 0.0
          %768 = vmatpush.msra.mxu0 0.0
          %769 = vmatpush.msra.mxu0 0.0
          %770 = vmatpush.msra.mxu0 0.0
          %771 = vmatpush.msra.mxu0 0.0
          %772 = vmatpush.msra.mxu0 0.0
          %773 = vmatpush.msra.mxu0 0.0
          %774 = vmatpush.msra.mxu0 0.0
          %v775 = vand.u32 %v598, 4294901760
          %776 = vmatpush.msra.mxu0 %v775
          %v777 = vand.u32 %v597, 4294901760
          %778 = vmatpush.msra.mxu0 %v777
          %v779 = vand.u32 %v596, 4294901760
          %780 = vmatpush.msra.mxu0 %v779
          %v781 = vand.u32 %v595, 4294901760
          %782 = vmatpush.msra.mxu0 %v781
          %v783 = vand.u32 %v601, 4294901760
          %784 = vmatmul.f32.gmra.mxu0 %v783
          %v785 = vpop.f32.mrf.mxu0
          %v786 = vadd.f32 %v761, %v785
          %787 = vdwg.mxu0
          %vm788 = vcmask 24576
          %789 = vst.msk [vmem:[%s298] sm:$0x1] %vm788, %v786
        $region52: #{tpu_custom_call.1} parent=43 // pred_fallthru
          _
        %s790 = sand.u32 %s178, 1
        %s791 = scalar_lea.sflag [#allocation6], %s790
        %s792 = sand.u32 %s178, 1
        %s793 = scalar_lea.vmem [#allocation5], %s792
        %s794 = sand.u32 %s204, 1
        %s795 = scalar_lea.sflag [#allocation8], %s794
        %s796 = sand.u32 %s204, 1
        %s797 = scalar_lea.vmem [#allocation7], %s796
        // Predicated region
        $region53: #{tpu_custom_call.1} parent=43 // pred_check
          %p798 = pneg %p188
        $region54: #{tpu_custom_call.1} parent=43 // pred_check_branch
          %800 = sbr.rel (%p798) target = $region56
        $region55: #{tpu_custom_call.1} parent=43 // pred_region
          %802 = vsyncadd %s791, 0
          %s803 = scalar_lea.hbm %s6, %s29
          %s805 = sshll.u32 %s793, 4
          %s806 = int_to_ptr.vmem [resolvable:$true] %s805
          %s807 = sshll.u32 %s803, 4
          %s808 = int_to_ptr.hbm [resolvable:$true] %s807
          %810 = dma.vmem_to_hbm [thread:$0]  %s806, 16, %s808, %s791
        $region56: #{tpu_custom_call.1} parent=43 // pred_fallthru
          _
        // Predicated region
        $region57: #{tpu_custom_call.1} parent=43 // pred_check
          %p811 = pneg %p214
        $region58: #{tpu_custom_call.1} parent=43 // pred_check_branch
          %813 = sbr.rel (%p811) target = $region60
        $region59: #{tpu_custom_call.1} parent=43 // pred_region
          %815 = vsyncadd %s795, 0
          %s816 = scalar_lea.hbm %s7, %s29
          %s818 = sshll.u32 %s797, 4
          %s819 = int_to_ptr.vmem [resolvable:$true] %s818
          %s820 = sshll.u32 %s816, 4
          %s821 = int_to_ptr.hbm [resolvable:$true] %s820
          %823 = dma.vmem_to_hbm [thread:$0]  %s819, 16, %s821, %s795
        $region60: #{tpu_custom_call.1} parent=43 // pred_fallthru
          _
      $region44: #{tpu_custom_call.1} parent=5 // pred_fallthru
        _
      %p824 = scmp.le.s32.totalorder 2, %s20
      // Predicated region
      $region61: #{tpu_custom_call.1} parent=5 // pred_check
        %p825 = pneg %p824
      $region62: #{tpu_custom_call.1} parent=5 // pred_check_branch
        %827 = sbr.rel (%p825) target = $region64
      $region63: #{tpu_custom_call.1} parent=5 // pred_region
        %s828 = ssub.s32 %s20, 2
        // Predicated region
        $region65: #{tpu_custom_call.1} parent=63 // pred_check
          %p829 = pneg %p194
        $region66: #{tpu_custom_call.1} parent=63 // pred_check_branch
          %831 = sbr.rel (%p829) target = $region68
        $region67: #{tpu_custom_call.1} parent=63 // pred_region
          %s832 = sand.u32 %s179, 1
          %s833 = scalar_lea.sflag [#allocation6], %s832
          %s834 = sand.u32 %s179, 1
          %s835 = scalar_lea.vmem [#allocation5], %s834
          %837 = dma.done %s833, 16
        $region68: #{tpu_custom_call.1} parent=63 // pred_fallthru
          _
        // Predicated region
        $region69: #{tpu_custom_call.1} parent=63 // pred_check
          %p838 = pneg %p220
        $region70: #{tpu_custom_call.1} parent=63 // pred_check_branch
          %840 = sbr.rel (%p838) target = $region72
        $region71: #{tpu_custom_call.1} parent=63 // pred_region
          %s841 = sand.u32 %s205, 1
          %s842 = scalar_lea.sflag [#allocation8], %s841
          %s843 = sand.u32 %s205, 1
          %s844 = scalar_lea.vmem [#allocation7], %s843
          %846 = dma.done %s842, 16
        $region72: #{tpu_custom_call.1} parent=63 // pred_fallthru
          _
      $region64: #{tpu_custom_call.1} parent=5 // pred_fallthru
        _
    $region6: #{tpu_custom_call.1} parent=1 // loop_footer
      %s24 = sadd.s32 1, %s20
    $region7: #{tpu_custom_call.1} parent=1 // loop_footer_branch
      %19 = sbr.rel target = $region3
    $region8: #{tpu_custom_call.1} parent=1 // loop_exit
      _
    %847 = vsyncpa [#allocation6], 1
    %s848 = scalar_lea.sflag [#allocation6], 1
    %849 = vsyncpa %s848, 1
    %850 = vsyncpa [#allocation8], 1
    %s851 = scalar_lea.sflag [#allocation8], 1
    %852 = vsyncpa %s851, 1

// kernel: tpu_custom_call.1
$region0: #{tpu_custom_call.1}
  #allocation0 [shape = 'u32[]', space=smem, size = 0x4, offset = 0x4, fixed_abs, tag = 'smem constant byte address 0x4 - core index']
  #allocation1 [shape = 'u32[72,128]{1,0:T(1,128)}', space=vmem, size = 0x9000, scoped, tag = 'internal scratch']
  #allocation2 [shape = 'f32[1,1]{1,0:T(1,128)}', space=vmem, size = 0x200, scoped, tag = 'scratch operand']
  #allocation3 [shape = 'f32[1,1]{1,0:T(1,128)}', space=vmem, size = 0x200, scoped, tag = 'scratch operand']
  #allocation4 [shape = 'f32[1,32]{1,0:T(1,128)}', space=vmem, size = 0x200, scoped, tag = 'scratch operand']
  %s0 = inlined_call_operand.vmem [shape: f32[2,8,32], index: 0, kind: input, shape index: {}]
  %s1 = inlined_call_operand.vmem [shape: f32[32,16], index: 1, kind: input, shape index: {}]
  %s2 = inlined_call_operand.vmem [shape: f32[1,16], index: 2, kind: input, shape index: {}]
  %s3 = inlined_call_operand.vmem [shape: f32[1,16], index: 3, kind: input, shape index: {}]
  %s4 = inlined_call_operand.vmem [shape: f32[32,4], index: 4, kind: input, shape index: {}]
  %s5 = inlined_call_operand.vmem [shape: f32[1,4], index: 5, kind: input, shape index: {}]
  %s6 = inlined_call_operand.hbm [shape: f32[2,1,32], index: 6, kind: output, shape index: {0}]
  %s7 = inlined_call_operand.hbm [shape: f32[2,1,4], index: 7, kind: output, shape index: {1}]
  %8 = xla_tuple %s6, %s7
  %s9 = sld [smem:[#allocation0]]
  $region73: #{tpu_custom_call.1} parent=0
    _
  %s11 = ssub.s32 1, %s9
  %s12 = scalar_select 0, %s11, %s9
  $region1: #{tpu_custom_call.1} parent=0
    #allocation5 [shape = 'u8[1024]{0}', space=vmem, size = 0x400, scoped, tag = 'output window, operand 0']
    #allocation6 [shape = 's32[2]{0}', space=sflag, size = 0x8, scoped, tag = 'scoped memory for tpu_custom_call.1']
    #allocation7 [shape = 'u8[1024]{0}', space=vmem, size = 0x400, scoped, tag = 'output window, operand 1']
    #allocation8 [shape = 's32[2]{0}', space=sflag, size = 0x8, scoped, tag = 'scoped memory for tpu_custom_call.1']
    %13 = vsyncpa [#allocation6], 0
    %s14 = scalar_lea.sflag [#allocation6], 1
    %15 = vsyncpa %s14, 0
    %16 = vsyncpa [#allocation8], 0
    %s17 = scalar_lea.sflag [#allocation8], 1
    %18 = vsyncpa %s17, 0
    loop: start=0, step=1, limit=4
    $region2: #{tpu_custom_call.1} parent=1 // loop_pre_header
      _
    $region3: #{tpu_custom_call.1} parent=1 // loop_header
      %s20 = sphi 0, %s24
      %p21 = scmp.ge.s32.totalorder %s20, 4
      %s27 = sphi 0, %s39
      %s28 = sphi 0, %s35
      %s29 = sphi 0, %s27
      %s30 = sphi 0, %s28
      %s31 = sphi 0, %s29
      %s32 = sphi 0, %s30
      %s44 = sphi 0, %s46
      %s47 = sphi 0, %s44
      %s48 = sphi 0, %s47
      %s64 = sphi 0, %s48
      %s68 = sphi 0, %s68
      %s70 = sphi 0, %s68
      %s71 = sphi 0, %s70
      %s85 = sphi 0, %s71
      %s89 = sphi 0, %s89
      %s91 = sphi 0, %s89
      %s92 = sphi 0, %s91
      %s106 = sphi 0, %s92
      %s110 = sphi 0, %s110
      %s112 = sphi 0, %s110
      %s113 = sphi 0, %s112
      %s127 = sphi 0, %s113
      %s131 = sphi 0, %s131
      %s133 = sphi 0, %s131
      %s134 = sphi 0, %s133
      %s148 = sphi 0, %s134
      %s152 = sphi 0, %s152
      %s154 = sphi 0, %s152
      %s155 = sphi 0, %s154
      %s169 = sphi 0, %s155
      %s175 = sphi 0, %s177
      %s178 = sphi 0, %s175
      %s179 = sphi 0, %s178
      %s195 = sphi 0, %s179
      %s201 = sphi 0, %s203
      %s204 = sphi 0, %s201
      %s205 = sphi 0, %s204
      %s221 = sphi 0, %s205
    $region4: #{tpu_custom_call.1} parent=1 // loop_header_branch
      %23 = sbr.rel (%p21) target = $region8
    $region5: #{tpu_custom_call.1} parent=1 // loop_body
      %s25 = ssub.s32 %s20, 1
      %s26 = ssub.s32 %s20, 2
      %s33 = sadd.s32 1, %s28
      %p34 = scmp.ge.s32.totalorder %s33, 1
      %s35 = scalar_select %p34, 0, %s33
      %s36 = sadd.s32 1, %s27
      %s37 = scalar_select %p34, %s36, %s27
      %p38 = scmp.ge.s32.totalorder %s37, 2
      %s39 = scalar_select %p38, 0, %s37
      %s40 = ssub.s32 %s27, %s39
      %s41 = ssub.s32 %s28, %s35
      %s42 = sor.u32 %s40, %s41
      %p43 = scmp.eq.s32.totalorder %s42, 0
      %s45 = sadd.s32 %s44, 1
      %s46 = scalar_select %p43, %s44, %s45
      %p49 = pneg %p43
      %p50 = scmp.eq.s32.totalorder %s20, 1
      %p51 = por %p49, %p50
      %p52 = scmp.ne.s32.totalorder %s44, %s47
      %p53 = scmp.eq.s32.totalorder %s20, 0
      %p54 = por %p52, %p53
      %p55 = scmp.ne.s32.totalorder %s44, %s47
      %p56 = scmp.eq.s32.totalorder %s25, 1
      %p57 = por %p55, %p56
      %p58 = scmp.ne.s32.totalorder %s47, %s48
      %p59 = scmp.eq.s32.totalorder %s25, 0
      %p60 = por %p58, %p59
      %p61 = scmp.ne.s32.totalorder %s47, %s48
      %p62 = scmp.eq.s32.totalorder %s26, 1
      %p63 = por %p61, %p62
      %p65 = scmp.ne.s32.totalorder %s48, %s64
      %p66 = scmp.eq.s32.totalorder %s26, 0
      %p67 = por %p65, %p66
      %s69 = sadd.s32 %s68, 1
      %p72 = scmp.eq.s32.totalorder %s20, 1
      %p73 = scmp.ne.s32.totalorder %s68, %s70
      %p74 = scmp.eq.s32.totalorder %s20, 0
      %p75 = por %p73, %p74
      %p76 = scmp.ne.s32.totalorder %s68, %s70
      %p77 = scmp.eq.s32.totalorder %s25, 1
      %p78 = por %p76, %p77
      %p79 = scmp.ne.s32.totalorder %s70, %s71
      %p80 = scmp.eq.s32.totalorder %s25, 0
      %p81 = por %p79, %p80
      %p82 = scmp.ne.s32.totalorder %s70, %s71
      %p83 = scmp.eq.s32.totalorder %s26, 1
      %p84 = por %p82, %p83
      %p86 = scmp.ne.s32.totalorder %s71, %s85
      %p87 = scmp.eq.s32.totalorder %s26, 0
      %p88 = por %p86, %p87
      %s90 = sadd.s32 %s89, 1
      %p93 = scmp.eq.s32.totalorder %s20, 1
      %p94 = scmp.ne.s32.totalorder %s89, %s91
      %p95 = scmp.eq.s32.totalorder %s20, 0
      %p96 = por %p94, %p95
      %p97 = scmp.ne.s32.totalorder %s89, %s91
      %p98 = scmp.eq.s32.totalorder %s25, 1
      %p99 = por %p97, %p98
      %p100 = scmp.ne.s32.totalorder %s91, %s92
      %p101 = scmp.eq.s32.totalorder %s25, 0
      %p102 = por %p100, %p101
      %p103 = scmp.ne.s32.totalorder %s91, %s92
      %p104 = scmp.eq.s32.totalorder %s26, 1
      %p105 = por %p103, %p104
      %p107 = scmp.ne.s32.totalorder %s92, %s106
      %p108 = scmp.eq.s32.totalorder %s26, 0
      %p109 = por %p107, %p108
      %s111 = sadd.s32 %s110, 1
      %p114 = scmp.eq.s32.totalorder %s20, 1
      %p115 = scmp.ne.s32.totalorder %s110, %s112
      %p116 = scmp.eq.s32.totalorder %s20, 0
      %p117 = por %p115, %p116
      %p118 = scmp.ne.s32.totalorder %s110, %s112
      %p119 = scmp.eq.s32.totalorder %s25, 1
      %p120 = por %p118, %p119
      %p121 = scmp.ne.s32.totalorder %s112, %s113
      %p122 = scmp.eq.s32.totalorder %s25, 0
      %p123 = por %p121, %p122
      %p124 = scmp.ne.s32.totalorder %s112, %s113
      %p125 = scmp.eq.s32.totalorder %s26, 1
      %p126 = por %p124, %p125
      %p128 = scmp.ne.s32.totalorder %s113, %s127
      %p129 = scmp.eq.s32.totalorder %s26, 0
      %p130 = por %p128, %p129
      %s132 = sadd.s32 %s131, 1
      %p135 = scmp.eq.s32.totalorder %s20, 1
      %p136 = scmp.ne.s32.totalorder %s131, %s133
      %p137 = scmp.eq.s32.totalorder %s20, 0
      %p138 = por %p136, %p137
      %p139 = scmp.ne.s32.totalorder %s131, %s133
      %p140 = scmp.eq.s32.totalorder %s25, 1
      %p141 = por %p139, %p140
      %p142 = scmp.ne.s32.totalorder %s133, %s134
      %p143 = scmp.eq.s32.totalorder %s25, 0
      %p144 = por %p142, %p143
      %p145 = scmp.ne.s32.totalorder %s133, %s134
      %p146 = scmp.eq.s32.totalorder %s26, 1
      %p147 = por %p145, %p146
      %p149 = scmp.ne.s32.totalorder %s134, %s148
      %p150 = scmp.eq.s32.totalorder %s26, 0
      %p151 = por %p149, %p150
      %s153 = sadd.s32 %s152, 1
      %p156 = scmp.eq.s32.totalorder %s20, 1
      %p157 = scmp.ne.s32.totalorder %s152, %s154
      %p158 = scmp.eq.s32.totalorder %s20, 0
      %p159 = por %p157, %p158
      %p160 = scmp.ne.s32.totalorder %s152, %s154
      %p161 = scmp.eq.s32.totalorder %s25, 1
      %p162 = por %p160, %p161
      %p163 = scmp.ne.s32.totalorder %s154, %s155
      %p164 = scmp.eq.s32.totalorder %s25, 0
      %p165 = por %p163, %p164
      %p166 = scmp.ne.s32.totalorder %s154, %s155
      %p167 = scmp.eq.s32.totalorder %s26, 1
      %p168 = por %p166, %p167
      %p170 = scmp.ne.s32.totalorder %s155, %s169
      %p171 = scmp.eq.s32.totalorder %s26, 0
      %p172 = por %p170, %p171
      %s173 = ssub.s32 %s27, %s39
      %p174 = scmp.eq.s32.totalorder %s173, 0
      %s176 = sadd.s32 %s175, 1
      %s177 = scalar_select %p174, %s175, %s176
      %p180 = pneg %p174
      %p181 = scmp.eq.s32.totalorder %s20, 1
      %p182 = por %p180, %p181
      %p183 = scmp.ne.s32.totalorder %s175, %s178
      %p184 = scmp.eq.s32.totalorder %s20, 0
      %p185 = por %p183, %p184
      %p186 = scmp.ne.s32.totalorder %s175, %s178
      %p187 = scmp.eq.s32.totalorder %s25, 1
      %p188 = por %p186, %p187
      %p189 = scmp.ne.s32.totalorder %s178, %s179
      %p190 = scmp.eq.s32.totalorder %s25, 0
      %p191 = por %p189, %p190
      %p192 = scmp.ne.s32.totalorder %s178, %s179
      %p193 = scmp.eq.s32.totalorder %s26, 1
      %p194 = por %p192, %p193
      %p196 = scmp.ne.s32.totalorder %s179, %s195
      %p197 = scmp.eq.s32.totalorder %s26, 0
      %p198 = por %p196, %p197
      %s199 = ssub.s32 %s27, %s39
      %p200 = scmp.eq.s32.totalorder %s199, 0
      %s202 = sadd.s32 %s201, 1
      %s203 = scalar_select %p200, %s201, %s202
      %p206 = pneg %p200
      %p207 = scmp.eq.s32.totalorder %s20, 1
      %p208 = por %p206, %p207
      %p209 = scmp.ne.s32.totalorder %s201, %s204
      %p210 = scmp.eq.s32.totalorder %s20, 0
      %p211 = por %p209, %p210
      %p212 = scmp.ne.s32.totalorder %s201, %s204
      %p213 = scmp.eq.s32.totalorder %s25, 1
      %p214 = por %p212, %p213
      %p215 = scmp.ne.s32.totalorder %s204, %s205
      %p216 = scmp.eq.s32.totalorder %s25, 0
      %p217 = por %p215, %p216
      %p218 = scmp.ne.s32.totalorder %s204, %s205
      %p219 = scmp.eq.s32.totalorder %s26, 1
      %p220 = por %p218, %p219
      %p222 = scmp.ne.s32.totalorder %s205, %s221
      %p223 = scmp.eq.s32.totalorder %s26, 0
      %p224 = por %p222, %p223
      %p225 = scmp.le.s32.totalorder 1, %s20
      %p226 = scmp.lt.s32.totalorder %s20, 3
      %p227 = pnand %p225, %p226
      %p228 = pneg %p227
      // Predicated region
      $region9: #{tpu_custom_call.1} parent=5 // pred_check
        _
      $region10: #{tpu_custom_call.1} parent=5 // pred_check_branch
        %230 = sbr.rel (%p227) target = $region12
      $region11: #{tpu_custom_call.1} parent=5 // pred_region
        %s231 = ssub.s32 %s20, 1
        // Predicated region
        $region13: #{tpu_custom_call.1} parent=11 // pred_check
          %p232 = pneg %p81
        $region14: #{tpu_custom_call.1} parent=11 // pred_check_branch
          %234 = sbr.rel (%p232) target = $region16
        $region15: #{tpu_custom_call.1} parent=11 // pred_region
          _
        $region16: #{tpu_custom_call.1} parent=11 // pred_fallthru
          _
        // Predicated region
        $region17: #{tpu_custom_call.1} parent=11 // pred_check
          %p235 = pneg %p102
        $region18: #{tpu_custom_call.1} parent=11 // pred_check_branch
          %237 = sbr.rel (%p235) target = $region20
        $region19: #{tpu_custom_call.1} parent=11 // pred_region
          _
        $region20: #{tpu_custom_call.1} parent=11 // pred_fallthru
          _
        // Predicated region
        $region21: #{tpu_custom_call.1} parent=11 // pred_check
          %p238 = pneg %p123
        $region22: #{tpu_custom_call.1} parent=11 // pred_check_branch
          %240 = sbr.rel (%p238) target = $region24
        $region23: #{tpu_custom_call.1} parent=11 // pred_region
          _
        $region24: #{tpu_custom_call.1} parent=11 // pred_fallthru
          _
        // Predicated region
        $region25: #{tpu_custom_call.1} parent=11 // pred_check
          %p241 = pneg %p144
        $region26: #{tpu_custom_call.1} parent=11 // pred_check_branch
          %243 = sbr.rel (%p241) target = $region28
        $region27: #{tpu_custom_call.1} parent=11 // pred_region
          _
        $region28: #{tpu_custom_call.1} parent=11 // pred_fallthru
          _
        // Predicated region
        $region29: #{tpu_custom_call.1} parent=11 // pred_check
          %p244 = pneg %p165
        $region30: #{tpu_custom_call.1} parent=11 // pred_check_branch
          %246 = sbr.rel (%p244) target = $region32
        $region31: #{tpu_custom_call.1} parent=11 // pred_region
          _
        $region32: #{tpu_custom_call.1} parent=11 // pred_fallthru
          _
      $region12: #{tpu_custom_call.1} parent=5 // pred_fallthru
        _
      %p247 = scmp.lt.s32.totalorder %s20, 2
      // Predicated region
      $region33: #{tpu_custom_call.1} parent=5 // pred_check
        %p248 = pneg %p247
      $region34: #{tpu_custom_call.1} parent=5 // pred_check_branch
        %250 = sbr.rel (%p248) target = $region36
      $region35: #{tpu_custom_call.1} parent=5 // pred_region
        // Predicated region
        $region37: #{tpu_custom_call.1} parent=35 // pred_check
          %p251 = pneg %p54
        $region38: #{tpu_custom_call.1} parent=35 // pred_check_branch
          %253 = sbr.rel (%p251) target = $region40
        $region39: #{tpu_custom_call.1} parent=35 // pred_region
          %p254 = scmp.lt.s32.totalorder %s27, 1
          %s255 = scalar_select %p254, %s27, 1
          %p256 = scmp.lt.s32.totalorder %s28, 0
          %s257 = scalar_select %p256, %s28, 0
          %s258 = sadd.s32 %s257, %s255
          %s259 = smul.addr %s258, 8
          %s260 = scalar_lea.vmem %s0, %s259
        $region40: #{tpu_custom_call.1} parent=35 // pred_fallthru
          _
      $region36: #{tpu_custom_call.1} parent=5 // pred_fallthru
        _
      %p261 = scmp.le.s32.totalorder 1, %s20
      %p262 = scmp.lt.s32.totalorder %s20, 3
      %p263 = pnand %p261, %p262
      %p264 = pneg %p263
      // Predicated region
      $region41: #{tpu_custom_call.1} parent=5 // pred_check
        _
      $region42: #{tpu_custom_call.1} parent=5 // pred_check_branch
        %266 = sbr.rel (%p263) target = $region44
      $region43: #{tpu_custom_call.1} parent=5 // pred_region
        %s267 = ssub.s32 %s20, 1
        %p268 = scmp.lt.s32.totalorder %s29, 1
        %s269 = scalar_select %p268, %s29, 1
        %p270 = scmp.lt.s32.totalorder %s30, 0
        %s271 = scalar_select %p270, %s30, 0
        %s272 = sadd.s32 %s271, %s269
        %s273 = smul.addr %s272, 8
        %s274 = scalar_lea.vmem %s0, %s273
        %p275 = pneg %p60
        %p276 = pneg %p57
        %p277 = pneg %p81
        %p278 = pneg %p78
        %p279 = pneg %p102
        %p280 = pneg %p99
        %p281 = pneg %p123
        %p282 = pneg %p120
        %p283 = pneg %p144
        %p284 = pneg %p141
        %p285 = pneg %p165
        %p286 = pneg %p162
        %p287 = pneg %p191
        %p288 = pneg %p188
        %s289 = sand.u32 %s178, 1
        %s290 = scalar_lea.sflag [#allocation6], %s289
        %s291 = sand.u32 %s178, 1
        %s292 = scalar_lea.vmem [#allocation5], %s291
        %p293 = pneg %p217
        %p294 = pneg %p214
        %s295 = sand.u32 %s204, 1
        %s296 = scalar_lea.sflag [#allocation8], %s295
        %s297 = sand.u32 %s204, 1
        %s298 = scalar_lea.vmem [#allocation7], %s297
        %p299 = scmp.lt.s32.totalorder %s29, 1
        %s300 = scalar_select %p299, %s29, 1
        %p301 = scmp.lt.s32.totalorder %s30, 0
        %s302 = scalar_select %p301, %s30, 0
        %s303 = sadd.s32 %s302, %s300
        %s304 = smul.addr %s303, 8
        %s305 = scalar_lea.vmem %s0, %s304
        %p306 = scmp.eq.s32.totalorder %s30, 0
        // Predicated region
        $region45: #{tpu_custom_call.1} parent=43 // pred_check
          %p307 = pneg %p306
        $region46: #{tpu_custom_call.1} parent=43 // pred_check_branch
          %309 = sbr.rel (%p307) target = $region48
        $region47: #{tpu_custom_call.1} parent=43 // pred_region
          %vm310 = vcmask 0
          %311 = vst.msk [vmem:[#allocation2] sm:$0x1] %vm310, -1e+30
          %312 = vst.msk [vmem:[#allocation3] sm:$0x1] %vm310, 0.0
          %vm313 = vcmask 253952
          %314 = vst.msk [vmem:[#allocation4] sm:$0x1] %vm313, 0.0
        $region48: #{tpu_custom_call.1} parent=43 // pred_fallthru
          _
        %v315 = vld [vmem:[%s305] sm:$0xff]
        %v316 = vld [vmem:[%s1] sm:$0xff]
        %v317 = vld [vmem:[%s1 + $0x8] sm:$0xff]
        %v318 = vld [vmem:[%s1 + $0x10] sm:$0xff]
        %v319 = vld [vmem:[%s1 + $0x18] sm:$0xff]
        %v320 = vld [vmem:[%s2] sm:$0x1]
        %v322 = vperm.slane %v320, 0
        %vm324 = vcmask 261120
        %v326 = vsel %vm324, %v315, 0
        %328 = vmatpush.msra.mxu0 0.0
        %329 = vmatpush.msra.mxu0 0.0
        %330 = vmatpush.msra.mxu0 0.0
        %331 = vmatpush.msra.mxu0 0.0
        %332 = vmatpush.msra.mxu0 0.0
        %333 = vmatpush.msra.mxu0 0.0
        %334 = vmatpush.msra.mxu0 0.0
        %335 = vmatpush.msra.mxu0 0.0
        %336 = vmatpush.msra.mxu0 0.0
        %337 = vmatpush.msra.mxu0 0.0
        %338 = vmatpush.msra.mxu0 0.0
        %339 = vmatpush.msra.mxu0 0.0
        %v340 = vand.u32 %v319, 4294901760
        %341 = vmatpush.msra.mxu0 %v340
        %v342 = vand.u32 %v318, 4294901760
        %343 = vmatpush.msra.mxu0 %v342
        %v344 = vand.u32 %v317, 4294901760
        %345 = vmatpush.msra.mxu0 %v344
        %v346 = vand.u32 %v316, 4294901760
        %347 = vmatpush.msra.mxu0 %v346
        %v348 = vand.u32 %v326, 4294901760
        %v349 = vsub.f32 %v326, %v348
        %v350 = vand.u32 %v349, 4294901760
        %v351 = vsub.f32 %v349, %v350
        %v352 = vand.u32 %v351, 4294901760
        %353 = vmatmul.f32.gmra.mxu0 %v352
        %v354 = vpop.f32.mrf.mxu0
        %v355 = vadd.f32 %v322, %v354
        %356 = vdwg.mxu0
        %357 = vmatpush.msra.mxu0 0.0
        %358 = vmatpush.msra.mxu0 0.0
        %359 = vmatpush.msra.mxu0 0.0
        %360 = vmatpush.msra.mxu0 0.0
        %361 = vmatpush.msra.mxu0 0.0
        %362 = vmatpush.msra.mxu0 0.0
        %363 = vmatpush.msra.mxu0 0.0
        %364 = vmatpush.msra.mxu0 0.0
        %365 = vmatpush.msra.mxu0 0.0
        %366 = vmatpush.msra.mxu0 0.0
        %367 = vmatpush.msra.mxu0 0.0
        %368 = vmatpush.msra.mxu0 0.0
        %v369 = vand.u32 %v319, 4294901760
        %v370 = vsub.f32 %v319, %v369
        %v371 = vand.u32 %v370, 4294901760
        %v372 = vsub.f32 %v370, %v371
        %v373 = vand.u32 %v372, 4294901760
        %374 = vmatpush.msra.mxu0 %v373
        %v375 = vand.u32 %v318, 4294901760
        %v376 = vsub.f32 %v318, %v375
        %v377 = vand.u32 %v376, 4294901760
        %v378 = vsub.f32 %v376, %v377
        %v379 = vand.u32 %v378, 4294901760
        %380 = vmatpush.msra.mxu0 %v379
        %v381 = vand.u32 %v317, 4294901760
        %v382 = vsub.f32 %v317, %v381
        %v383 = vand.u32 %v382, 4294901760
        %v384 = vsub.f32 %v382, %v383
        %v385 = vand.u32 %v384, 4294901760
        %386 = vmatpush.msra.mxu0 %v385
        %v387 = vand.u32 %v316, 4294901760
        %v388 = vsub.f32 %v316, %v387
        %v389 = vand.u32 %v388, 4294901760
        %v390 = vsub.f32 %v388, %v389
        %v391 = vand.u32 %v390, 4294901760
        %392 = vmatpush.msra.mxu0 %v391
        %v393 = vand.u32 %v326, 4294901760
        %394 = vmatmul.f32.gmra.mxu0 %v393
        %v395 = vpop.f32.mrf.mxu0
        %v396 = vadd.f32 %v355, %v395
        %397 = vdwg.mxu0
        %398 = vmatpush.msra.mxu0 0.0
        %399 = vmatpush.msra.mxu0 0.0
        %400 = vmatpush.msra.mxu0 0.0
        %401 = vmatpush.msra.mxu0 0.0
        %402 = vmatpush.msra.mxu0 0.0
        %403 = vmatpush.msra.mxu0 0.0
        %404 = vmatpush.msra.mxu0 0.0
        %405 = vmatpush.msra.mxu0 0.0
        %406 = vmatpush.msra.mxu0 0.0
        %407 = vmatpush.msra.mxu0 0.0
        %408 = vmatpush.msra.mxu0 0.0
        %409 = vmatpush.msra.mxu0 0.0
        %v410 = vand.u32 %v319, 4294901760
        %v411 = vsub.f32 %v319, %v410
        %412 = vmatpush.msra.mxu0 %v411
        %v413 = vand.u32 %v318, 4294901760
        %v414 = vsub.f32 %v318, %v413
        %415 = vmatpush.msra.mxu0 %v414
        %v416 = vand.u32 %v317, 4294901760
        %v417 = vsub.f32 %v317, %v416
        %418 = vmatpush.msra.mxu0 %v417
        %v419 = vand.u32 %v316, 4294901760
        %v420 = vsub.f32 %v316, %v419
        %421 = vmatpush.msra.mxu0 %v420
        %v422 = vand.u32 %v326, 4294901760
        %v423 = vsub.f32 %v326, %v422
        %424 = vmatmul.f32.gmra.mxu0 %v423
        %v425 = vpop.f32.mrf.mxu0
        %v426 = vadd.f32 %v396, %v425
        %427 = vdwg.mxu0
        %428 = vmatpush.msra.mxu0 0.0
        %429 = vmatpush.msra.mxu0 0.0
        %430 = vmatpush.msra.mxu0 0.0
        %431 = vmatpush.msra.mxu0 0.0
        %432 = vmatpush.msra.mxu0 0.0
        %433 = vmatpush.msra.mxu0 0.0
        %434 = vmatpush.msra.mxu0 0.0
        %435 = vmatpush.msra.mxu0 0.0
        %436 = vmatpush.msra.mxu0 0.0
        %437 = vmatpush.msra.mxu0 0.0
        %438 = vmatpush.msra.mxu0 0.0
        %439 = vmatpush.msra.mxu0 0.0
        %v440 = vand.u32 %v319, 4294901760
        %441 = vmatpush.msra.mxu0 %v440
        %v442 = vand.u32 %v318, 4294901760
        %443 = vmatpush.msra.mxu0 %v442
        %v444 = vand.u32 %v317, 4294901760
        %445 = vmatpush.msra.mxu0 %v444
        %v446 = vand.u32 %v316, 4294901760
        %447 = vmatpush.msra.mxu0 %v446
        %v448 = vand.u32 %v326, 4294901760
        %v449 = vsub.f32 %v326, %v448
        %v450 = vand.u32 %v449, 4294901760
        %451 = vmatmul.f32.gmra.mxu0 %v450
        %v452 = vpop.f32.mrf.mxu0
        %v453 = vadd.f32 %v426, %v452
        %454 = vdwg.mxu0
        %455 = vmatpush.msra.mxu0 0.0
        %456 = vmatpush.msra.mxu0 0.0
        %457 = vmatpush.msra.mxu0 0.0
        %458 = vmatpush.msra.mxu0 0.0
        %459 = vmatpush.msra.mxu0 0.0
        %460 = vmatpush.msra.mxu0 0.0
        %461 = vmatpush.msra.mxu0 0.0
        %462 = vmatpush.msra.mxu0 0.0
        %463 = vmatpush.msra.mxu0 0.0
        %464 = vmatpush.msra.mxu0 0.0
        %465 = vmatpush.msra.mxu0 0.0
        %466 = vmatpush.msra.mxu0 0.0
        %v467 = vand.u32 %v319, 4294901760
        %v468 = vsub.f32 %v319, %v467
        %v469 = vand.u32 %v468, 4294901760
        %470 = vmatpush.msra.mxu0 %v469
        %v471 = vand.u32 %v318, 4294901760
        %v472 = vsub.f32 %v318, %v471
        %v473 = vand.u32 %v472, 4294901760
        %474 = vmatpush.msra.mxu0 %v473
        %v475 = vand.u32 %v317, 4294901760
        %v476 = vsub.f32 %v317, %v475
        %v477 = vand.u32 %v476, 4294901760
        %478 = vmatpush.msra.mxu0 %v477
        %v479 = vand.u32 %v316, 4294901760
        %v480 = vsub.f32 %v316, %v479
        %v481 = vand.u32 %v480, 4294901760
        %482 = vmatpush.msra.mxu0 %v481
        %v483 = vand.u32 %v326, 4294901760
        %484 = vmatmul.f32.gmra.mxu0 %v483
        %v485 = vpop.f32.mrf.mxu0
        %v486 = vadd.f32 %v453, %v485
        %487 = vdwg.mxu0
        %488 = vmatpush.msra.mxu0 0.0
        %489 = vmatpush.msra.mxu0 0.0
        %490 = vmatpush.msra.mxu0 0.0
        %491 = vmatpush.msra.mxu0 0.0
        %492 = vmatpush.msra.mxu0 0.0
        %493 = vmatpush.msra.mxu0 0.0
        %494 = vmatpush.msra.mxu0 0.0
        %495 = vmatpush.msra.mxu0 0.0
        %496 = vmatpush.msra.mxu0 0.0
        %497 = vmatpush.msra.mxu0 0.0
        %498 = vmatpush.msra.mxu0 0.0
        %499 = vmatpush.msra.mxu0 0.0
        %v500 = vand.u32 %v319, 4294901760
        %501 = vmatpush.msra.mxu0 %v500
        %v502 = vand.u32 %v318, 4294901760
        %503 = vmatpush.msra.mxu0 %v502
        %v504 = vand.u32 %v317, 4294901760
        %505 = vmatpush.msra.mxu0 %v504
        %v506 = vand.u32 %v316, 4294901760
        %507 = vmatpush.msra.mxu0 %v506
        %v508 = vand.u32 %v326, 4294901760
        %509 = vmatmul.f32.gmra.mxu0 %v508
        %v510 = vpop.f32.mrf.mxu0
        %v511 = vadd.f32 %v486, %v510
        %512 = vdwg.mxu0
        %v513 = vtanh.pop %v511
        %v514 = vld [vmem:[%s3] sm:$0x1]
        %v516 = vperm.slane %v514, 0
        %v518 = vmul.f32 %v513, %v516
        %vm519 = vcmask 130048
        %v520 = vsel %vm519, %v518, 0.0
        %521 = vadd.xlane.f32.xlu0 %v520
        %v522 = vpop.xlane.xlu0 %521
        %v523 = vld [vmem:[#allocation2] sm:$0x1]
        %v524 = vrot.slane %v522, 4
        %v525 = vmax.f32 %v522, %v524
        %v526 = vrot.slane %v525, 2
        %v527 = vmax.f32 %v525, %v526
        %v528 = vrot.slane %v527, 1
        %v529 = vmax.f32 %v527, %v528
        %v530 = vmax.f32 %v523, %v529
        %v531 = vsub.f32 %v523, %v530
        %v532 = vmul.f32 %v531, 1.442695
        %v533 = vpow.pop %v532
        %v535 = vperm.slane %v530, 0
        %v537 = vsub.f32 %v522, %v535
        %v538 = vmul.f32 %v537, 1.442695
        %v539 = vpow.pop %v538
        %v540 = vld [vmem:[#allocation3] sm:$0x1]
        %v541 = vmul.f32 %v533, %v540
        %vm542 = vcmask 7168
        %v543 = vsel %vm542, %v539, 0.0
        %v544 = vrot.slane %v543, 4
        %v545 = vadd.f32 %v543, %v544
        %v546 = vrot.slane %v545, 2
        %v547 = vadd.f32 %v545, %v546
        %v548 = vrot.slane %v547, 1
        %v549 = vadd.f32 %v547, %v548
        %v550 = vadd.f32 %v541, %v549
        %vm551 = vcmask 0
        %552 = vst.msk [vmem:[#allocation3] sm:$0x1] %vm551, %v550
        %v553 = vld [vmem:[#allocation4] sm:$0x1]
        %555 = vset.pattern.permute.xlu0 0
        %556 = vperm.xlu0 %555, %v533
        %v557 = vpop.permute.xlu0 %556
        %v559 = vperm.slane %v557, 0
        %v560 = vmul.f32 %v559, %v553
        %562 = vset.pattern.permute.xlu0 0
        %563 = vperm.xlu0 %562, %v539
        %v564 = vpop.permute.xlu0 %563
        %v566 = vmul.f32 %v564, %v315
        %v567 = vsel %vm324, %v566, 0.0
        %v568 = vrot.slane %v567, 4
        %v569 = vadd.f32 %v567, %v568
        %v570 = vrot.slane %v569, 2
        %v571 = vadd.f32 %v569, %v570
        %v572 = vrot.slane %v571, 1
        %v573 = vadd.f32 %v571, %v572
        %v574 = vadd.f32 %v560, %v573
        %vm575 = vcmask 253952
        %576 = vst.msk [vmem:[#allocation4] sm:$0x1] %vm575, %v574
        %577 = vst.msk [vmem:[#allocation2] sm:$0x1] %vm551, %v530
        // Predicated region
        $region49: #{tpu_custom_call.1} parent=43 // pred_check
          %p578 = pneg %p306
        $region50: #{tpu_custom_call.1} parent=43 // pred_check_branch
          %580 = sbr.rel (%p578) target = $region52
        $region51: #{tpu_custom_call.1} parent=43 // pred_region
          %v581 = vld [vmem:[#allocation3] sm:$0x1]
          %v582 = vrcp.pop %v581
          %v583 = vmul.f32 %v581, %v582
          %v584 = vsub.f32 2.0, %v583
          %v585 = vmul.f32 %v582, %v584
          %v586 = vld [vmem:[#allocation4] sm:$0x1]
          %588 = vset.pattern.permute.xlu0 0
          %589 = vperm.xlu0 %588, %v585
          %v590 = vpop.permute.xlu0 %589
          %v592 = vperm.slane %v590, 0
          %v593 = vmul.f32 %v586, %v592
          %594 = vst.msk [vmem:[%s292] sm:$0x1] %vm575, %v593
          %v595 = vld [vmem:[%s4] sm:$0xff]
          %v596 = vld [vmem:[%s4 + $0x8] sm:$0xff]
          %v597 = vld [vmem:[%s4 + $0x10] sm:$0xff]
          %v598 = vld [vmem:[%s4 + $0x18] sm:$0xff]
          %v599 = vld [vmem:[%s5] sm:$0x1]
          %v601 = vsel %vm324, %v593, 0
          %603 = vmatpush.msra.mxu0 0.0
          %604 = vmatpush.msra.mxu0 0.0
          %605 = vmatpush.msra.mxu0 0.0
          %606 = vmatpush.msra.mxu0 0.0
          %607 = vmatpush.msra.mxu0 0.0
          %608 = vmatpush.msra.mxu0 0.0
          %609 = vmatpush.msra.mxu0 0.0
          %610 = vmatpush.msra.mxu0 0.0
          %611 = vmatpush.msra.mxu0 0.0
          %612 = vmatpush.msra.mxu0 0.0
          %613 = vmatpush.msra.mxu0 0.0
          %614 = vmatpush.msra.mxu0 0.0
          %v615 = vand.u32 %v598, 4294901760
          %616 = vmatpush.msra.mxu0 %v615
          %v617 = vand.u32 %v597, 4294901760
          %618 = vmatpush.msra.mxu0 %v617
          %v619 = vand.u32 %v596, 4294901760
          %620 = vmatpush.msra.mxu0 %v619
          %v621 = vand.u32 %v595, 4294901760
          %622 = vmatpush.msra.mxu0 %v621
          %v623 = vand.u32 %v601, 4294901760
          %v624 = vsub.f32 %v601, %v623
          %v625 = vand.u32 %v624, 4294901760
          %v626 = vsub.f32 %v624, %v625
          %v627 = vand.u32 %v626, 4294901760
          %628 = vmatmul.f32.gmra.mxu0 %v627
          %v629 = vpop.f32.mrf.mxu0
          %v630 = vadd.f32 %v599, %v629
          %631 = vdwg.mxu0
          %632 = vmatpush.msra.mxu0 0.0
          %633 = vmatpush.msra.mxu0 0.0
          %634 = vmatpush.msra.mxu0 0.0
          %635 = vmatpush.msra.mxu0 0.0
          %636 = vmatpush.msra.mxu0 0.0
          %637 = vmatpush.msra.mxu0 0.0
          %638 = vmatpush.msra.mxu0 0.0
          %639 = vmatpush.msra.mxu0 0.0
          %640 = vmatpush.msra.mxu0 0.0
          %641 = vmatpush.msra.mxu0 0.0
          %642 = vmatpush.msra.mxu0 0.0
          %643 = vmatpush.msra.mxu0 0.0
          %v644 = vand.u32 %v598, 4294901760
          %v645 = vsub.f32 %v598, %v644
          %v646 = vand.u32 %v645, 4294901760
          %v647 = vsub.f32 %v645, %v646
          %v648 = vand.u32 %v647, 4294901760
          %649 = vmatpush.msra.mxu0 %v648
          %v650 = vand.u32 %v597, 4294901760
          %v651 = vsub.f32 %v597, %v650
          %v652 = vand.u32 %v651, 4294901760
          %v653 = vsub.f32 %v651, %v652
          %v654 = vand.u32 %v653, 4294901760
          %655 = vmatpush.msra.mxu0 %v654
          %v656 = vand.u32 %v596, 4294901760
          %v657 = vsub.f32 %v596, %v656
          %v658 = vand.u32 %v657, 4294901760
          %v659 = vsub.f32 %v657, %v658
          %v660 = vand.u32 %v659, 4294901760
          %661 = vmatpush.msra.mxu0 %v660
          %v662 = vand.u32 %v595, 4294901760
          %v663 = vsub.f32 %v595, %v662
          %v664 = vand.u32 %v663, 4294901760
          %v665 = vsub.f32 %v663, %v664
          %v666 = vand.u32 %v665, 4294901760
          %667 = vmatpush.msra.mxu0 %v666
          %v668 = vand.u32 %v601, 4294901760
          %669 = vmatmul.f32.gmra.mxu0 %v668
          %v670 = vpop.f32.mrf.mxu0
          %v671 = vadd.f32 %v630, %v670
          %672 = vdwg.mxu0
          %673 = vmatpush.msra.mxu0 0.0
          %674 = vmatpush.msra.mxu0 0.0
          %675 = vmatpush.msra.mxu0 0.0
          %676 = vmatpush.msra.mxu0 0.0
          %677 = vmatpush.msra.mxu0 0.0
          %678 = vmatpush.msra.mxu0 0.0
          %679 = vmatpush.msra.mxu0 0.0
          %680 = vmatpush.msra.mxu0 0.0
          %681 = vmatpush.msra.mxu0 0.0
          %682 = vmatpush.msra.mxu0 0.0
          %683 = vmatpush.msra.mxu0 0.0
          %684 = vmatpush.msra.mxu0 0.0
          %v685 = vand.u32 %v598, 4294901760
          %v686 = vsub.f32 %v598, %v685
          %687 = vmatpush.msra.mxu0 %v686
          %v688 = vand.u32 %v597, 4294901760
          %v689 = vsub.f32 %v597, %v688
          %690 = vmatpush.msra.mxu0 %v689
          %v691 = vand.u32 %v596, 4294901760
          %v692 = vsub.f32 %v596, %v691
          %693 = vmatpush.msra.mxu0 %v692
          %v694 = vand.u32 %v595, 4294901760
          %v695 = vsub.f32 %v595, %v694
          %696 = vmatpush.msra.mxu0 %v695
          %v697 = vand.u32 %v601, 4294901760
          %v698 = vsub.f32 %v601, %v697
          %699 = vmatmul.f32.gmra.mxu0 %v698
          %v700 = vpop.f32.mrf.mxu0
          %v701 = vadd.f32 %v671, %v700
          %702 = vdwg.mxu0
          %703 = vmatpush.msra.mxu0 0.0
          %704 = vmatpush.msra.mxu0 0.0
          %705 = vmatpush.msra.mxu0 0.0
          %706 = vmatpush.msra.mxu0 0.0
          %707 = vmatpush.msra.mxu0 0.0
          %708 = vmatpush.msra.mxu0 0.0
          %709 = vmatpush.msra.mxu0 0.0
          %710 = vmatpush.msra.mxu0 0.0
          %711 = vmatpush.msra.mxu0 0.0
          %712 = vmatpush.msra.mxu0 0.0
          %713 = vmatpush.msra.mxu0 0.0
          %714 = vmatpush.msra.mxu0 0.0
          %v715 = vand.u32 %v598, 4294901760
          %716 = vmatpush.msra.mxu0 %v715
          %v717 = vand.u32 %v597, 4294901760
          %718 = vmatpush.msra.mxu0 %v717
          %v719 = vand.u32 %v596, 4294901760
          %720 = vmatpush.msra.mxu0 %v719
          %v721 = vand.u32 %v595, 4294901760
          %722 = vmatpush.msra.mxu0 %v721
          %v723 = vand.u32 %v601, 4294901760
          %v724 = vsub.f32 %v601, %v723
          %v725 = vand.u32 %v724, 4294901760
          %726 = vmatmul.f32.gmra.mxu0 %v725
          %v727 = vpop.f32.mrf.mxu0
          %v728 = vadd.f32 %v701, %v727
          %729 = vdwg.mxu0
          %730 = vmatpush.msra.mxu0 0.0
          %731 = vmatpush.msra.mxu0 0.0
          %732 = vmatpush.msra.mxu0 0.0
          %733 = vmatpush.msra.mxu0 0.0
          %734 = vmatpush.msra.mxu0 0.0
          %735 = vmatpush.msra.mxu0 0.0
          %736 = vmatpush.msra.mxu0 0.0
          %737 = vmatpush.msra.mxu0 0.0
          %738 = vmatpush.msra.mxu0 0.0
          %739 = vmatpush.msra.mxu0 0.0
          %740 = vmatpush.msra.mxu0 0.0
          %741 = vmatpush.msra.mxu0 0.0
          %v742 = vand.u32 %v598, 4294901760
          %v743 = vsub.f32 %v598, %v742
          %v744 = vand.u32 %v743, 4294901760
          %745 = vmatpush.msra.mxu0 %v744
          %v746 = vand.u32 %v597, 4294901760
          %v747 = vsub.f32 %v597, %v746
          %v748 = vand.u32 %v747, 4294901760
          %749 = vmatpush.msra.mxu0 %v748
          %v750 = vand.u32 %v596, 4294901760
          %v751 = vsub.f32 %v596, %v750
          %v752 = vand.u32 %v751, 4294901760
          %753 = vmatpush.msra.mxu0 %v752
          %v754 = vand.u32 %v595, 4294901760
          %v755 = vsub.f32 %v595, %v754
          %v756 = vand.u32 %v755, 4294901760
          %757 = vmatpush.msra.mxu0 %v756
          %v758 = vand.u32 %v601, 4294901760
          %759 = vmatmul.f32.gmra.mxu0 %v758
          %v760 = vpop.f32.mrf.mxu0
          %v761 = vadd.f32 %v728, %v760
          %762 = vdwg.mxu0
          %763 = vmatpush.msra.mxu0 0.0
          %764 = vmatpush.msra.mxu0 0.0
          %765 = vmatpush.msra.mxu0 0.0
          %766 = vmatpush.msra.mxu0 0.0
          %767 = vmatpush.msra.mxu0 0.0
          %768 = vmatpush.msra.mxu0 0.0
          %769 = vmatpush.msra.mxu0 0.0
          %770 = vmatpush.msra.mxu0 0.0
          %771 = vmatpush.msra.mxu0 0.0
          %772 = vmatpush.msra.mxu0 0.0
          %773 = vmatpush.msra.mxu0 0.0
          %774 = vmatpush.msra.mxu0 0.0
          %v775 = vand.u32 %v598, 4294901760
          %776 = vmatpush.msra.mxu0 %v775
          %v777 = vand.u32 %v597, 4294901760
          %778 = vmatpush.msra.mxu0 %v777
          %v779 = vand.u32 %v596, 4294901760
          %780 = vmatpush.msra.mxu0 %v779
          %v781 = vand.u32 %v595, 4294901760
          %782 = vmatpush.msra.mxu0 %v781
          %v783 = vand.u32 %v601, 4294901760
          %784 = vmatmul.f32.gmra.mxu0 %v783
          %v785 = vpop.f32.mrf.mxu0
          %v786 = vadd.f32 %v761, %v785
          %787 = vdwg.mxu0
          %vm788 = vcmask 24576
          %789 = vst.msk [vmem:[%s298] sm:$0x1] %vm788, %v786
        $region52: #{tpu_custom_call.1} parent=43 // pred_fallthru
          _
        %s790 = sand.u32 %s178, 1
        %s791 = scalar_lea.sflag [#allocation6], %s790
        %s792 = sand.u32 %s178, 1
        %s793 = scalar_lea.vmem [#allocation5], %s792
        %s794 = sand.u32 %s204, 1
        %s795 = scalar_lea.sflag [#allocation8], %s794
        %s796 = sand.u32 %s204, 1
        %s797 = scalar_lea.vmem [#allocation7], %s796
        // Predicated region
        $region53: #{tpu_custom_call.1} parent=43 // pred_check
          %p798 = pneg %p188
        $region54: #{tpu_custom_call.1} parent=43 // pred_check_branch
          %800 = sbr.rel (%p798) target = $region56
        $region55: #{tpu_custom_call.1} parent=43 // pred_region
          %802 = vsyncadd %s791, 0
          %s803 = scalar_lea.hbm %s6, %s29
          %s805 = sshll.u32 %s793, 4
          %s806 = int_to_ptr.vmem [resolvable:$true] %s805
          %s807 = sshll.u32 %s803, 4
          %s808 = int_to_ptr.hbm [resolvable:$true] %s807
          %810 = dma.vmem_to_hbm [thread:$0]  %s806, 16, %s808, %s791
        $region56: #{tpu_custom_call.1} parent=43 // pred_fallthru
          _
        // Predicated region
        $region57: #{tpu_custom_call.1} parent=43 // pred_check
          %p811 = pneg %p214
        $region58: #{tpu_custom_call.1} parent=43 // pred_check_branch
          %813 = sbr.rel (%p811) target = $region60
        $region59: #{tpu_custom_call.1} parent=43 // pred_region
          %815 = vsyncadd %s795, 0
          %s816 = scalar_lea.hbm %s7, %s29
          %s818 = sshll.u32 %s797, 4
          %s819 = int_to_ptr.vmem [resolvable:$true] %s818
          %s820 = sshll.u32 %s816, 4
          %s821 = int_to_ptr.hbm [resolvable:$true] %s820
          %823 = dma.vmem_to_hbm [thread:$0]  %s819, 16, %s821, %s795
        $region60: #{tpu_custom_call.1} parent=43 // pred_fallthru
          _
      $region44: #{tpu_custom_call.1} parent=5 // pred_fallthru
        _
      %p824 = scmp.le.s32.totalorder 2, %s20
      // Predicated region
      $region61: #{tpu_custom_call.1} parent=5 // pred_check
        %p825 = pneg %p824
      $region62: #{tpu_custom_call.1} parent=5 // pred_check_branch
        %827 = sbr.rel (%p825) target = $region64
      $region63: #{tpu_custom_call.1} parent=5 // pred_region
        %s828 = ssub.s32 %s20, 2
        // Predicated region
        $region65: #{tpu_custom_call.1} parent=63 // pred_check
          %p829 = pneg %p194
        $region66: #{tpu_custom_call.1} parent=63 // pred_check_branch
          %831 = sbr.rel (%p829) target = $region68
        $region67: #{tpu_custom_call.1} parent=63 // pred_region
          %s832 = sand.u32 %s179, 1
          %s833 = scalar_lea.sflag [#allocation6], %s832
          %s834 = sand.u32 %s179, 1
          %s835 = scalar_lea.vmem [#allocation5], %s834
          %837 = dma.done %s833, 16
        $region68: #{tpu_custom_call.1} parent=63 // pred_fallthru
          _
        // Predicated region
        $region69: #{tpu_custom_call.1} parent=63 // pred_check
          %p838 = pneg %p220
        $region70: #{tpu_custom_call.1} parent=63 // pred_check_branch
          %840 = sbr.rel (%p838) target = $region72
        $region71: #{tpu_custom_call.1} parent=63 // pred_region
          %s841 = sand.u32 %s205, 1
          %s842 = scalar_lea.sflag [#allocation8], %s841
          %s843 = sand.u32 %s205, 1
          %s844 = scalar_lea.vmem [#allocation7], %s843
          %846 = dma.done %s842, 16
        $region72: #{tpu_custom_call.1} parent=63 // pred_fallthru
          _
      $region64: #{tpu_custom_call.1} parent=5 // pred_fallthru
        _
    $region6: #{tpu_custom_call.1} parent=1 // loop_footer
      %s24 = sadd.s32 1, %s20
    $region7: #{tpu_custom_call.1} parent=1 // loop_footer_branch
      %19 = sbr.rel target = $region3
    $region8: #{tpu_custom_call.1} parent=1 // loop_exit
      _
    %847 = vsyncpa [#allocation6], 1
    %s848 = scalar_lea.sflag [#allocation6], 1
    %849 = vsyncpa %s848, 1
    %850 = vsyncpa [#allocation8], 1
    %s851 = scalar_lea.sflag [#allocation8], 1
    %852 = vsyncpa %s851, 1

</llo_original>
